<compile_context>
chip_gen: v5e
topology: v5e:2x2
jax: 0.10.0
libtpu: 0.0.40
codegen_flags: <defaults>
</compile_context>

<pallas_src>
import math
from functools import partial

import jax
import jax.numpy as jnp
from jax.experimental import pallas as pl
from jax.experimental.pallas import tpu as pltpu

# ---- model hyper-parameters (small, consistent with the module) -------------
VOCAB = 32
N_EMBD = 32
BLOCK_SIZE = 8          # max sequence length
N_HEAD = 4
N_LAYER = 2
HEAD_SIZE = N_EMBD // N_HEAD
FF_HIDDEN = 4 * N_EMBD
LN_EPS = 1e-5

B = 2
T = BLOCK_SIZE


# ---------------------------------------------------------------------------
# helpers (pure jnp -> usable both inside the kernel and in the reference)
# ---------------------------------------------------------------------------
def _layernorm(x, gamma, beta):
    mu = jnp.mean(x, axis=-1, keepdims=True)
    var = jnp.mean((x - mu) ** 2, axis=-1, keepdims=True)
    return (x - mu) * jax.lax.rsqrt(var + LN_EPS) * gamma + beta


# ---------------------------------------------------------------------------
# fused encoder kernel: grid = (N_LAYER,), one transformer block per step,
# activations carried across steps in the resident output block.
# ---------------------------------------------------------------------------
def fused_encoder_kernel(Bx, Tx,
                         idx_ref, tok_emb_ref, pos_ref,
                         sp_ref, wqkv_ref, wo_ref, w1_ref, b1_ref, w2_ref,
                         lnfg_ref, lnfb_ref,
                         x_ref, attn_ref):
    l = pl.program_id(0)
    BT = Bx * Tx

    # ---- layer 0: fused token-embedding gather (one-hot matmul) + pos add ---
    @pl.when(l == 0)
    def _init():
        onehot = (idx_ref[...] ==
                  jax.lax.broadcasted_iota(jnp.int32, (BT, VOCAB), 1)
                  ).astype(jnp.float32)
        tok = jnp.dot(onehot, tok_emb_ref[...],
                      preferred_element_type=jnp.float32)           # (BT, C)
        pos = jnp.concatenate([pos_ref[...]] * Bx, axis=0)          # (BT, C)
        x_ref[...] = tok + pos

    x = x_ref[...]                                                  # (BT, C)

    sp = sp_ref[0]                     # (6, C): ln1_g, ln1_b, bo, ln2_g, ln2_b, b2
    ln1g, ln1b, bo = sp[0:1], sp[1:2], sp[2:3]
    ln2g, ln2b, b2 = sp[3:4], sp[4:5], sp[5:6]

    # ---- multi-head self-attention (pre-LN, un-masked: encoder) ----
    xn = _layernorm(x, ln1g, ln1b)                                  # (BT, C)
    xnh = jnp.broadcast_to(xn[None], (N_HEAD, BT, N_EMBD))          # (H, BT, C)
    wqkv = wqkv_ref[0]                                              # (3H, C, hs)
    q = jnp.einsum("htc,hcd->htd", xnh, wqkv[:N_HEAD],
                   preferred_element_type=jnp.float32)              # (H, BT, hs)
    k = jnp.einsum("htc,hcd->htd", xnh, wqkv[N_HEAD:2 * N_HEAD],
                   preferred_element_type=jnp.float32)
    v = jnp.einsum("htc,hcd->htd", xnh, wqkv[2 * N_HEAD:],
                   preferred_element_type=jnp.float32)

    scale = 1.0 / math.sqrt(HEAD_SIZE)
    ctx_parts, attn_rows = [], []
    for b in range(Bx):                  # static unroll; attention is per-sequence
        rows = slice(b * Tx, (b + 1) * Tx)                          # sublane slice
        qb, kb, vb = q[:, rows, :], k[:, rows, :], v[:, rows, :]    # (H, T, hs)
        s = jnp.einsum("htd,hsd->hts", qb, kb,
                       preferred_element_type=jnp.float32) * scale  # (H, T, T)
        s = s - jnp.max(s, axis=-1, keepdims=True)
        e = jnp.exp(s)
        p = e * pl.reciprocal(jnp.sum(e, axis=-1, keepdims=True), approx=True)
        # lane-dense (T, H*T) slab per batch element
        attn_rows.append(jnp.concatenate([p[h] for h in range(N_HEAD)], axis=-1))
        ctx_parts.append(jnp.einsum("hts,hsd->htd", p, vb,
                                    preferred_element_type=jnp.float32))
    attn_ref[...] = jnp.stack(attn_rows, axis=0)[None]              # (1,B,T,H*T)

    ctx = jnp.concatenate(ctx_parts, axis=1)                        # (H, BT, hs)
    proj = jnp.einsum("htd,hdc->htc", ctx, wo_ref[0],
                      preferred_element_type=jnp.float32)           # (H, BT, C)
    x = x + jnp.sum(proj, axis=0) + bo                              # residual 1

    # ---- feed-forward ----
    xn2 = _layernorm(x, ln2g, ln2b)
    h1 = jnp.maximum(
        jnp.dot(xn2, w1_ref[0], preferred_element_type=jnp.float32) + b1_ref[0],
        0.0)
    x = x + jnp.dot(h1, w2_ref[0], preferred_element_type=jnp.float32) + b2

    last = pl.num_programs(0) - 1

    @pl.when(l < last)
    def _carry():
        x_ref[...] = x                                              # carry to next layer

    @pl.when(l == last)
    def _final():
        x_ref[...] = _layernorm(x, lnfg_ref[...], lnfb_ref[...])    # fused final LN


# ---------------------------------------------------------------------------
# host-side weight packing: stack per-layer params along L, split/merge heads
# ---------------------------------------------------------------------------
def pack_params(params):
    L = N_LAYER

    def stk(key):
        return jnp.stack([blk[key] for blk in params["blocks"]], axis=0)

    # Wq/Wk/Wv: (L, C, C) -> (L, H, C, hs)   (column blocks per head)
    def split_cols(w):
        return w.reshape(L, N_EMBD, N_HEAD, HEAD_SIZE).transpose(0, 2, 1, 3)

    wqkv = jnp.concatenate([split_cols(stk("wq")),
                            split_cols(stk("wk")),
                            split_cols(stk("wv"))], axis=1)          # (L, 3H, C, hs)
    wo = stk("wo").reshape(L, N_HEAD, HEAD_SIZE, N_EMBD)             # (L, H, hs, C)
    small = jnp.concatenate([stk("ln1_g"), stk("ln1_b"), stk("bo"),
                             stk("ln2_g"), stk("ln2_b"), stk("b2")],
                            axis=1)                                  # (L, 6, C)
    return [small, wqkv, wo, stk("w1"), stk("b1"), stk("w2")]


# ---------------------------------------------------------------------------
# forward pass: a single pallas_call for the whole model
# ---------------------------------------------------------------------------
def encoder_forward(params, idx):
    """idx: (B, T) int32 -> (x: (B, T, C), attn_maps: list of (B, H, T, T))."""
    Bx, Tx = idx.shape
    C = N_EMBD
    BT = Bx * Tx
    L = N_LAYER

    idx2 = idx.reshape(BT, 1).astype(jnp.int32)
    pos = params["pos_emb"][:Tx]
    packed = pack_params(params)

    def resident(shape):
        n = len(shape)
        return pl.BlockSpec(shape, lambda l, n=n: (0,) * n)

    def per_layer(shape):
        n = len(shape) - 1
        return pl.BlockSpec((1,) + tuple(shape[1:]),
                            lambda l, n=n: (l,) + (0,) * n)

    in_specs = [
        resident((BT, 1)),                         # token ids
        resident((VOCAB, C)),                      # token embedding table
        resident((Tx, C)),                         # position embedding
        per_layer((L, 6, C)),                      # ln1 g/b, bo, ln2 g/b, b2
        per_layer((L, 3 * N_HEAD, C, HEAD_SIZE)),  # Wq|Wk|Wv (head-split)
        per_layer((L, N_HEAD, HEAD_SIZE, C)),      # Wo (head-split rows)
        per_layer((L, C, FF_HIDDEN)),              # W1
        per_layer((L, 1, FF_HIDDEN)),              # b1
        per_layer((L, FF_HIDDEN, C)),              # W2
        resident((1, C)), resident((1, C)),        # final LN g/b
    ]
    out_specs = [
        resident((BT, C)),                                               # carried x
        pl.BlockSpec((1, Bx, Tx, N_HEAD * Tx), lambda l: (l, 0, 0, 0)),  # attn maps
    ]
    out_shape = [
        jax.ShapeDtypeStruct((BT, C), jnp.float32),
        jax.ShapeDtypeStruct((L, Bx, Tx, N_HEAD * Tx), jnp.float32),
    ]

    x_out, attn_packed = pl.pallas_call(
        partial(fused_encoder_kernel, Bx, Tx),
        grid=(L,),
        in_specs=in_specs,
        out_specs=out_specs,
        out_shape=out_shape,
        compiler_params=pltpu.CompilerParams(
            dimension_semantics=("arbitrary",)),   # layers are sequential (carried x)
    )(idx2, params["tok_emb"], pos, *packed, params["lnf_g"], params["lnf_b"])

    # unpack lane-dense attention maps: (L, B, T, H*T) -> list of (B, H, T, T)
    attn_maps = [attn_packed[l].reshape(Bx, Tx, N_HEAD, Tx).transpose(0, 2, 1, 3)
                 for l in range(L)]
    return x_out.reshape(Bx, Tx, C), attn_maps


encoder_forward_jit = jax.jit(encoder_forward)


# ---------------------------------------------------------------------------
# pure-JAX reference (same math, PyTorch-style per-head layout)
# ---------------------------------------------------------------------------
def encoder_reference(params, idx):
    Bx, Tx = idx.shape
    hp = jax.lax.Precision.HIGHEST
    x = jnp.take(params["tok_emb"], idx, axis=0) + params["pos_emb"][:Tx][None, :, :]
    attn_maps = []
    for blk in params["blocks"]:
        xn = _layernorm(x, blk["ln1_g"], blk["ln1_b"])
        q = jnp.einsum("btc,cd->btd", xn, blk["wq"], precision=hp)
        k = jnp.einsum("btc,cd->btd", xn, blk["wk"], precision=hp)
        v = jnp.einsum("btc,cd->btd", xn, blk["wv"], precision=hp)
        qh = q.reshape(Bx, Tx, N_HEAD, HEAD_SIZE)
        kh = k.reshape(Bx, Tx, N_HEAD, HEAD_SIZE)
        vh = v.reshape(Bx, Tx, N_HEAD, HEAD_SIZE)
        s = jnp.einsum("bthd,bshd->bhts", qh, kh, precision=hp) / math.sqrt(HEAD_SIZE)
        p = jax.nn.softmax(s, axis=-1)
        attn_maps.append(p)
        ctx = jnp.einsum("bhts,bshd->bthd", p, vh, precision=hp).reshape(Bx, Tx, N_EMBD)
        x = x + jnp.einsum("btc,cd->btd", ctx, blk["wo"], precision=hp) + blk["bo"]
        xn2 = _layernorm(x, blk["ln2_g"], blk["ln2_b"])
        h = jax.nn.relu(jnp.einsum("btc,cf->btf", xn2, blk["w1"], precision=hp) + blk["b1"])
        x = x + jnp.einsum("btf,fc->btc", h, blk["w2"], precision=hp) + blk["b2"]
    x = _layernorm(x, params["lnf_g"], params["lnf_b"])
    return x, attn_maps


# ---------------------------------------------------------------------------
# parameter init (deterministic, synthetic)
# ---------------------------------------------------------------------------
def init_params(key):
    n_block_keys = 6
    keys = jax.random.split(key, 2 + N_LAYER * n_block_keys)
    params = {
        "tok_emb": jax.random.normal(keys[0], (VOCAB, N_EMBD), jnp.float32) * 0.02,
        "pos_emb": jax.random.normal(keys[1], (BLOCK_SIZE, N_EMBD), jnp.float32) * 0.02,
        "lnf_g": jnp.ones((1, N_EMBD), jnp.float32),
        "lnf_b": jnp.zeros((1, N_EMBD), jnp.float32),
        "blocks": [],
    }
    for l in range(N_LAYER):
        k = keys[2 + l * n_block_keys: 2 + (l + 1) * n_block_keys]
        blk = {
            "ln1_g": jnp.ones((1, N_EMBD), jnp.float32),
            "ln1_b": jnp.zeros((1, N_EMBD), jnp.float32),
            "wq": jax.random.normal(k[0], (N_EMBD, N_EMBD), jnp.float32) * 0.02,
            "wk": jax.random.normal(k[1], (N_EMBD, N_EMBD), jnp.float32) * 0.02,
            "wv": jax.random.normal(k[2], (N_EMBD, N_EMBD), jnp.float32) * 0.02,
            "wo": jax.random.normal(k[3], (N_EMBD, N_EMBD), jnp.float32) * 0.02,
            "bo": jnp.zeros((1, N_EMBD), jnp.float32),
            "ln2_g": jnp.ones((1, N_EMBD), jnp.float32),
            "ln2_b": jnp.zeros((1, N_EMBD), jnp.float32),
            "w1": jax.random.normal(k[4], (N_EMBD, FF_HIDDEN), jnp.float32) * 0.02,
            "b1": jnp.zeros((1, FF_HIDDEN), jnp.float32),
            "w2": jax.random.normal(k[5], (FF_HIDDEN, N_EMBD), jnp.float32) * 0.02,
            "b2": jnp.zeros((1, N_EMBD), jnp.float32),
        }
        params["blocks"].append(blk)
    return params


# ---------------------------------------------------------------------------
if __name__ == "__main__":
    key = jax.random.PRNGKey(0)
    pkey, ikey = jax.random.split(key)
    params = init_params(pkey)
    idx = jax.random.randint(ikey, (B, T), 0, VOCAB, dtype=jnp.int32)

    x_out, attn_maps = encoder_forward_jit(params, idx)
    x_out = jax.block_until_ready(x_out)
    attn_maps = [jax.block_until_ready(a) for a in attn_maps]

    # shape / sanity checks
    assert x_out.shape == (B, T, N_EMBD)
    assert len(attn_maps) == N_LAYER
    assert attn_maps[0].shape == (B, N_HEAD, T, T)
    assert bool(jnp.all(jnp.isfinite(x_out)))
    # every attention row is a softmax distribution (loose tol: approx reciprocal)
    for a in attn_maps:
        assert bool(jnp.allclose(a.sum(-1), 1.0, atol=1e-2))

    # cross-check against a pure-JAX reference of the same module
    x_ref, attn_ref = encoder_reference(params, idx)
    assert bool(jnp.allclose(x_out, x_ref, atol=2e-2))
    for a, ar in zip(attn_maps, attn_ref):
        assert bool(jnp.allclose(a, ar, atol=1e-2))

    print("KERNEL_OK")
</pallas_src>

<mosaic_0001>
module attributes {stable_mosaic.version = 11 : i64} {
  func.func @fused_encoder_kernel(%arg0: i32, %arg1: memref<16x1xi32, #tpu.memory_space<vmem>>, %arg2: memref<32x32xf32, #tpu.memory_space<vmem>>, %arg3: memref<8x32xf32, #tpu.memory_space<vmem>>, %arg4: memref<1x6x32xf32, #tpu.memory_space<vmem>>, %arg5: memref<1x12x32x8xf32, #tpu.memory_space<vmem>>, %arg6: memref<1x4x8x32xf32, #tpu.memory_space<vmem>>, %arg7: memref<1x32x128xf32, #tpu.memory_space<vmem>>, %arg8: memref<1x1x128xf32, #tpu.memory_space<vmem>>, %arg9: memref<1x128x32xf32, #tpu.memory_space<vmem>>, %arg10: memref<1x32xf32, #tpu.memory_space<vmem>>, %arg11: memref<1x32xf32, #tpu.memory_space<vmem>>, %arg12: memref<16x32xf32, #tpu.memory_space<vmem>>, %arg13: memref<1x2x8x32xf32, #tpu.memory_space<vmem>>) attributes {dimension_semantics = [#tpu.dimension_semantics<arbitrary>], iteration_bounds = array<i64: 2>, scalar_prefetch = 0 : i64, scratch_operands = 0 : i64, tpu.core_type = #tpu.core_type<tc>, window_params = [{pipeline_mode = #tpu.pipeline_mode<synchronous>, transform_indices = @transform_0, window_bounds = array<i64: 16, 1>}, {pipeline_mode = #tpu.pipeline_mode<synchronous>, transform_indices = @transform_1, window_bounds = array<i64: 32, 32>}, {pipeline_mode = #tpu.pipeline_mode<synchronous>, transform_indices = @transform_2, window_bounds = array<i64: 8, 32>}, {transform_indices = @transform_3, window_bounds = array<i64: 1, 6, 32>}, {transform_indices = @transform_4, window_bounds = array<i64: 1, 12, 32, 8>}, {transform_indices = @transform_5, window_bounds = array<i64: 1, 4, 8, 32>}, {transform_indices = @transform_6, window_bounds = array<i64: 1, 32, 128>}, {transform_indices = @transform_7, window_bounds = array<i64: 1, 1, 128>}, {transform_indices = @transform_8, window_bounds = array<i64: 1, 128, 32>}, {pipeline_mode = #tpu.pipeline_mode<synchronous>, transform_indices = @transform_9, window_bounds = array<i64: 1, 32>}, {pipeline_mode = #tpu.pipeline_mode<synchronous>, transform_indices = @transform_10, window_bounds = array<i64: 1, 32>}, {pipeline_mode = #tpu.pipeline_mode<synchronous>, transform_indices = @transform_11, window_bounds = array<i64: 16, 32>}, {transform_indices = @transform_12, window_bounds = array<i64: 1, 2, 8, 32>}]} {
    %c0_i32 = arith.constant 0 : i32
    %0 = arith.cmpi eq, %arg0, %c0_i32 : i32
    %1 = arith.extui %0 : i1 to i32
    %c0_i32_0 = arith.constant 0 : i32
    %2 = arith.cmpi ne, %1, %c0_i32_0 : i32
    scf.if %2 {
      %c0_56 = arith.constant 0 : index
      %c0_57 = arith.constant 0 : index
      %153 = vector.load %arg1[%c0_56, %c0_57] : memref<16x1xi32, #tpu.memory_space<vmem>>, vector<16x1xi32>
      %154 = tpu.iota {dimensions = array<i32: 1>} : vector<16x32xi32>
      %155 = vector.broadcast %153 : vector<16x1xi32> to vector<16x32xi32>
      %156 = arith.cmpi eq, %155, %154 : vector<16x32xi32>
      %157 = arith.extui %156 : vector<16x32xi1> to vector<16x32xi32>
      %158 = arith.sitofp %157 : vector<16x32xi32> to vector<16x32xf32>
      %c0_58 = arith.constant 0 : index
      %c0_59 = arith.constant 0 : index
      %159 = vector.load %arg2[%c0_58, %c0_59] : memref<32x32xf32, #tpu.memory_space<vmem>>, vector<32x32xf32>
      %cst_60 = arith.constant dense<0.000000e+00> : vector<16x32xf32>
      %160 = tpu.matmul %158, %159, %cst_60 {dimension_numbers = #tpu.dot_dimension_numbers<[1], [0], [0], [1], [0, 0, 1, 1], [], []>} : vector<16x32xf32>, vector<32x32xf32>, vector<16x32xf32> -> vector<16x32xf32>
      %c0_61 = arith.constant 0 : index
      %c0_62 = arith.constant 0 : index
      %161 = vector.load %arg3[%c0_61, %c0_62] : memref<8x32xf32, #tpu.memory_space<vmem>>, vector<8x32xf32>
      %162 = tpu.concatenate %161, %161 in 0 : vector<8x32xf32>, vector<8x32xf32> -> vector<16x32xf32>
      %163 = arith.addf %160, %162 : vector<16x32xf32>
      %c0_63 = arith.constant 0 : index
      %c0_64 = arith.constant 0 : index
      %164 = vector.load %arg12[%c0_63, %c0_64] : memref<16x32xf32, #tpu.memory_space<vmem>>, vector<16x32xf32>
      tpu.vector_store %arg12[%c0_63, %c0_64], %163 {strides = array<i32>} : memref<16x32xf32, #tpu.memory_space<vmem>>, vector<16x32xf32>,
    } else {
    }
    %c0 = arith.constant 0 : index
    %c0_1 = arith.constant 0 : index
    %3 = vector.load %arg12[%c0, %c0_1] : memref<16x32xf32, #tpu.memory_space<vmem>>, vector<16x32xf32>
    %c0_2 = arith.constant 0 : index
    %c0_3 = arith.constant 0 : index
    %c0_4 = arith.constant 0 : index
    %4 = vector.load %arg4[%c0_2, %c0_3, %c0_4] : memref<1x6x32xf32, #tpu.memory_space<vmem>>, vector<1x6x32xf32>
    %5 = vector.shape_cast %4 : vector<1x6x32xf32> to vector<6x32xf32>
    %6 = vector.extract_strided_slice %5 {offsets = [0, 0], sizes = [1, 32], strides = [1, 1]} : vector<6x32xf32> to vector<1x32xf32>
    %7 = vector.extract_strided_slice %5 {offsets = [1, 0], sizes = [1, 32], strides = [1, 1]} : vector<6x32xf32> to vector<1x32xf32>
    %8 = vector.extract_strided_slice %5 {offsets = [2, 0], sizes = [1, 32], strides = [1, 1]} : vector<6x32xf32> to vector<1x32xf32>
    %9 = vector.extract_strided_slice %5 {offsets = [3, 0], sizes = [1, 32], strides = [1, 1]} : vector<6x32xf32> to vector<1x32xf32>
    %10 = vector.extract_strided_slice %5 {offsets = [4, 0], sizes = [1, 32], strides = [1, 1]} : vector<6x32xf32> to vector<1x32xf32>
    %11 = vector.extract_strided_slice %5 {offsets = [5, 0], sizes = [1, 32], strides = [1, 1]} : vector<6x32xf32> to vector<1x32xf32>
    %cst = arith.constant dense<0.000000e+00> : vector<16xf32>
    %12 = vector.multi_reduction <add>, %3, %cst [1] : vector<16x32xf32> to vector<16xf32>
    %13 = vector.shape_cast %12 : vector<16xf32> to vector<16x1xf32>
    %cst_5 = arith.constant 3.200000e+01 : f32
    %14 = vector.broadcast %cst_5 : f32 to vector<16x1xf32>
    %15 = arith.divf %13, %14 : vector<16x1xf32>
    %16 = vector.broadcast %15 : vector<16x1xf32> to vector<16x32xf32>
    %17 = arith.subf %3, %16 : vector<16x32xf32>
    %18 = arith.mulf %17, %17 : vector<16x32xf32>
    %cst_6 = arith.constant dense<0.000000e+00> : vector<16xf32>
    %19 = vector.multi_reduction <add>, %18, %cst_6 [1] : vector<16x32xf32> to vector<16xf32>
    %20 = vector.shape_cast %19 : vector<16xf32> to vector<16x1xf32>
    %cst_7 = arith.constant 3.200000e+01 : f32
    %21 = vector.broadcast %cst_7 : f32 to vector<16x1xf32>
    %22 = arith.divf %20, %21 : vector<16x1xf32>
    %23 = vector.broadcast %15 : vector<16x1xf32> to vector<16x32xf32>
    %24 = arith.subf %3, %23 : vector<16x32xf32>
    %cst_8 = arith.constant 9.99999974E-6 : f32
    %25 = vector.broadcast %cst_8 : f32 to vector<16x1xf32>
    %26 = arith.addf %22, %25 : vector<16x1xf32>
    %27 = math.rsqrt %26 : vector<16x1xf32>
    %28 = vector.broadcast %27 : vector<16x1xf32> to vector<16x32xf32>
    %29 = arith.mulf %24, %28 : vector<16x32xf32>
    %30 = vector.broadcast %6 : vector<1x32xf32> to vector<16x32xf32>
    %31 = arith.mulf %29, %30 : vector<16x32xf32>
    %32 = vector.broadcast %7 : vector<1x32xf32> to vector<16x32xf32>
    %33 = arith.addf %31, %32 : vector<16x32xf32>
    %34 = vector.shape_cast %33 : vector<16x32xf32> to vector<1x16x32xf32>
    %35 = vector.shape_cast %34 : vector<1x16x32xf32> to vector<1x16x32xf32>
    %36 = vector.broadcast %35 : vector<1x16x32xf32> to vector<4x16x32xf32>
    %c0_9 = arith.constant 0 : index
    %c0_10 = arith.constant 0 : index
    %c0_11 = arith.constant 0 : index
    %c0_12 = arith.constant 0 : index
    %37 = vector.load %arg5[%c0_9, %c0_10, %c0_11, %c0_12] : memref<1x12x32x8xf32, #tpu.memory_space<vmem>>, vector<1x12x32x8xf32>
    %38 = vector.shape_cast %37 : vector<1x12x32x8xf32> to vector<12x32x8xf32>
    %39 = vector.extract_strided_slice %38 {offsets = [0, 0, 0], sizes = [4, 32, 8], strides = [1, 1, 1]} : vector<12x32x8xf32> to vector<4x32x8xf32>
    "tpu.trace_start"() <{level = 10 : i32, message = "htc,hcd->htd"}> : () -> ()
    %cst_13 = arith.constant dense<0.000000e+00> : vector<4x16x8xf32>
    %40 = tpu.matmul %36, %39, %cst_13 {dimension_numbers = #tpu.dot_dimension_numbers<[2], [1], [1], [2], [0, 0, 0, 1, 1, 2], [0], [0]>} : vector<4x16x32xf32>, vector<4x32x8xf32>, vector<4x16x8xf32> -> vector<4x16x8xf32>
    "tpu.trace_stop"() : () -> ()
    %41 = vector.extract_strided_slice %38 {offsets = [4, 0, 0], sizes = [4, 32, 8], strides = [1, 1, 1]} : vector<12x32x8xf32> to vector<4x32x8xf32>
    "tpu.trace_start"() <{level = 10 : i32, message = "htc,hcd->htd"}> : () -> ()
    %cst_14 = arith.constant dense<0.000000e+00> : vector<4x16x8xf32>
    %42 = tpu.matmul %36, %41, %cst_14 {dimension_numbers = #tpu.dot_dimension_numbers<[2], [1], [1], [2], [0, 0, 0, 1, 1, 2], [0], [0]>} : vector<4x16x32xf32>, vector<4x32x8xf32>, vector<4x16x8xf32> -> vector<4x16x8xf32>
    "tpu.trace_stop"() : () -> ()
    %43 = vector.extract_strided_slice %38 {offsets = [8, 0, 0], sizes = [4, 32, 8], strides = [1, 1, 1]} : vector<12x32x8xf32> to vector<4x32x8xf32>
    "tpu.trace_start"() <{level = 10 : i32, message = "htc,hcd->htd"}> : () -> ()
    %cst_15 = arith.constant dense<0.000000e+00> : vector<4x16x8xf32>
    %44 = tpu.matmul %36, %43, %cst_15 {dimension_numbers = #tpu.dot_dimension_numbers<[2], [1], [1], [2], [0, 0, 0, 1, 1, 2], [0], [0]>} : vector<4x16x32xf32>, vector<4x32x8xf32>, vector<4x16x8xf32> -> vector<4x16x8xf32>
    "tpu.trace_stop"() : () -> ()
    %45 = vector.extract_strided_slice %40 {offsets = [0, 0, 0], sizes = [4, 8, 8], strides = [1, 1, 1]} : vector<4x16x8xf32> to vector<4x8x8xf32>
    %46 = vector.extract_strided_slice %42 {offsets = [0, 0, 0], sizes = [4, 8, 8], strides = [1, 1, 1]} : vector<4x16x8xf32> to vector<4x8x8xf32>
    %47 = vector.extract_strided_slice %44 {offsets = [0, 0, 0], sizes = [4, 8, 8], strides = [1, 1, 1]} : vector<4x16x8xf32> to vector<4x8x8xf32>
    "tpu.trace_start"() <{level = 10 : i32, message = "htd,hsd->hts"}> : () -> ()
    %cst_16 = arith.constant dense<0.000000e+00> : vector<4x8x8xf32>
    %48 = tpu.matmul %45, %46, %cst_16 {dimension_numbers = #tpu.dot_dimension_numbers<[2], [2], [1], [1], [0, 0, 0, 1, 1, 1], [0], [0]>} : vector<4x8x8xf32>, vector<4x8x8xf32>, vector<4x8x8xf32> -> vector<4x8x8xf32>
    "tpu.trace_stop"() : () -> ()
    %cst_17 = arith.constant 0.353553385 : f32
    %49 = vector.broadcast %cst_17 : f32 to vector<4x8x8xf32>
    %50 = arith.mulf %48, %49 : vector<4x8x8xf32>
    %cst_18 = arith.constant dense<0xFF800000> : vector<4x8xf32>
    %51 = vector.multi_reduction <maximumf>, %50, %cst_18 [2] : vector<4x8x8xf32> to vector<4x8xf32>
    %52 = vector.shape_cast %51 : vector<4x8xf32> to vector<4x8x1xf32>
    %53 = vector.broadcast %52 : vector<4x8x1xf32> to vector<4x8x8xf32>
    %54 = arith.subf %50, %53 : vector<4x8x8xf32>
    %55 = math.exp %54 : vector<4x8x8xf32>
    %cst_19 = arith.constant dense<0.000000e+00> : vector<4x8xf32>
    %56 = vector.multi_reduction <add>, %55, %cst_19 [2] : vector<4x8x8xf32> to vector<4x8xf32>
    %57 = vector.shape_cast %56 : vector<4x8xf32> to vector<4x8x1xf32>
    %58 = tpu.reciprocal %57 {approx = true} : vector<4x8x1xf32> -> vector<4x8x1xf32>
    %59 = vector.broadcast %58 : vector<4x8x1xf32> to vector<4x8x8xf32>
    %60 = arith.mulf %55, %59 : vector<4x8x8xf32>
    %61 = vector.extract_strided_slice %60 {offsets = [0, 0, 0], sizes = [1, 8, 8], strides = [1, 1, 1]} : vector<4x8x8xf32> to vector<1x8x8xf32>
    %62 = vector.shape_cast %61 : vector<1x8x8xf32> to vector<8x8xf32>
    %63 = vector.extract_strided_slice %60 {offsets = [1, 0, 0], sizes = [1, 8, 8], strides = [1, 1, 1]} : vector<4x8x8xf32> to vector<1x8x8xf32>
    %64 = vector.shape_cast %63 : vector<1x8x8xf32> to vector<8x8xf32>
    %65 = vector.extract_strided_slice %60 {offsets = [2, 0, 0], sizes = [1, 8, 8], strides = [1, 1, 1]} : vector<4x8x8xf32> to vector<1x8x8xf32>
    %66 = vector.shape_cast %65 : vector<1x8x8xf32> to vector<8x8xf32>
    %67 = vector.extract_strided_slice %60 {offsets = [3, 0, 0], sizes = [1, 8, 8], strides = [1, 1, 1]} : vector<4x8x8xf32> to vector<1x8x8xf32>
    %68 = vector.shape_cast %67 : vector<1x8x8xf32> to vector<8x8xf32>
    %69 = tpu.concatenate %62, %64, %66, %68 in 1 : vector<8x8xf32>, vector<8x8xf32>, vector<8x8xf32>, vector<8x8xf32> -> vector<8x32xf32>
    "tpu.trace_start"() <{level = 10 : i32, message = "hts,hsd->htd"}> : () -> ()
    %cst_20 = arith.constant dense<0.000000e+00> : vector<4x8x8xf32>
    %70 = tpu.matmul %60, %47, %cst_20 {dimension_numbers = #tpu.dot_dimension_numbers<[2], [1], [1], [2], [0, 0, 0, 1, 1, 2], [0], [0]>} : vector<4x8x8xf32>, vector<4x8x8xf32>, vector<4x8x8xf32> -> vector<4x8x8xf32>
    "tpu.trace_stop"() : () -> ()
    %71 = vector.extract_strided_slice %40 {offsets = [0, 8, 0], sizes = [4, 8, 8], strides = [1, 1, 1]} : vector<4x16x8xf32> to vector<4x8x8xf32>
    %72 = vector.extract_strided_slice %42 {offsets = [0, 8, 0], sizes = [4, 8, 8], strides = [1, 1, 1]} : vector<4x16x8xf32> to vector<4x8x8xf32>
    %73 = vector.extract_strided_slice %44 {offsets = [0, 8, 0], sizes = [4, 8, 8], strides = [1, 1, 1]} : vector<4x16x8xf32> to vector<4x8x8xf32>
    "tpu.trace_start"() <{level = 10 : i32, message = "htd,hsd->hts"}> : () -> ()
    %cst_21 = arith.constant dense<0.000000e+00> : vector<4x8x8xf32>
    %74 = tpu.matmul %71, %72, %cst_21 {dimension_numbers = #tpu.dot_dimension_numbers<[2], [2], [1], [1], [0, 0, 0, 1, 1, 1], [0], [0]>} : vector<4x8x8xf32>, vector<4x8x8xf32>, vector<4x8x8xf32> -> vector<4x8x8xf32>
    "tpu.trace_stop"() : () -> ()
    %cst_22 = arith.constant 0.353553385 : f32
    %75 = vector.broadcast %cst_22 : f32 to vector<4x8x8xf32>
    %76 = arith.mulf %74, %75 : vector<4x8x8xf32>
    %cst_23 = arith.constant dense<0xFF800000> : vector<4x8xf32>
    %77 = vector.multi_reduction <maximumf>, %76, %cst_23 [2] : vector<4x8x8xf32> to vector<4x8xf32>
    %78 = vector.shape_cast %77 : vector<4x8xf32> to vector<4x8x1xf32>
    %79 = vector.broadcast %78 : vector<4x8x1xf32> to vector<4x8x8xf32>
    %80 = arith.subf %76, %79 : vector<4x8x8xf32>
    %81 = math.exp %80 : vector<4x8x8xf32>
    %cst_24 = arith.constant dense<0.000000e+00> : vector<4x8xf32>
    %82 = vector.multi_reduction <add>, %81, %cst_24 [2] : vector<4x8x8xf32> to vector<4x8xf32>
    %83 = vector.shape_cast %82 : vector<4x8xf32> to vector<4x8x1xf32>
    %84 = tpu.reciprocal %83 {approx = true} : vector<4x8x1xf32> -> vector<4x8x1xf32>
    %85 = vector.broadcast %84 : vector<4x8x1xf32> to vector<4x8x8xf32>
    %86 = arith.mulf %81, %85 : vector<4x8x8xf32>
    %87 = vector.extract_strided_slice %86 {offsets = [0, 0, 0], sizes = [1, 8, 8], strides = [1, 1, 1]} : vector<4x8x8xf32> to vector<1x8x8xf32>
    %88 = vector.shape_cast %87 : vector<1x8x8xf32> to vector<8x8xf32>
    %89 = vector.extract_strided_slice %86 {offsets = [1, 0, 0], sizes = [1, 8, 8], strides = [1, 1, 1]} : vector<4x8x8xf32> to vector<1x8x8xf32>
    %90 = vector.shape_cast %89 : vector<1x8x8xf32> to vector<8x8xf32>
    %91 = vector.extract_strided_slice %86 {offsets = [2, 0, 0], sizes = [1, 8, 8], strides = [1, 1, 1]} : vector<4x8x8xf32> to vector<1x8x8xf32>
    %92 = vector.shape_cast %91 : vector<1x8x8xf32> to vector<8x8xf32>
    %93 = vector.extract_strided_slice %86 {offsets = [3, 0, 0], sizes = [1, 8, 8], strides = [1, 1, 1]} : vector<4x8x8xf32> to vector<1x8x8xf32>
    %94 = vector.shape_cast %93 : vector<1x8x8xf32> to vector<8x8xf32>
    %95 = tpu.concatenate %88, %90, %92, %94 in 1 : vector<8x8xf32>, vector<8x8xf32>, vector<8x8xf32>, vector<8x8xf32> -> vector<8x32xf32>
    "tpu.trace_start"() <{level = 10 : i32, message = "hts,hsd->htd"}> : () -> ()
    %cst_25 = arith.constant dense<0.000000e+00> : vector<4x8x8xf32>
    %96 = tpu.matmul %86, %73, %cst_25 {dimension_numbers = #tpu.dot_dimension_numbers<[2], [1], [1], [2], [0, 0, 0, 1, 1, 2], [0], [0]>} : vector<4x8x8xf32>, vector<4x8x8xf32>, vector<4x8x8xf32> -> vector<4x8x8xf32>
    "tpu.trace_stop"() : () -> ()
    %97 = vector.shape_cast %69 : vector<8x32xf32> to vector<1x8x32xf32>
    %98 = vector.shape_cast %95 : vector<8x32xf32> to vector<1x8x32xf32>
    %99 = tpu.concatenate %97, %98 in 0 : vector<1x8x32xf32>, vector<1x8x32xf32> -> vector<2x8x32xf32>
    %100 = vector.shape_cast %99 : vector<2x8x32xf32> to vector<1x2x8x32xf32>
    %c0_26 = arith.constant 0 : index
    %c0_27 = arith.constant 0 : index
    %c0_28 = arith.constant 0 : index
    %c0_29 = arith.constant 0 : index
    %101 = vector.load %arg13[%c0_26, %c0_27, %c0_28, %c0_29] : memref<1x2x8x32xf32, #tpu.memory_space<vmem>>, vector<1x2x8x32xf32>
    tpu.vector_store %arg13[%c0_26, %c0_27, %c0_28, %c0_29], %100 {strides = array<i32>} : memref<1x2x8x32xf32, #tpu.memory_space<vmem>>, vector<1x2x8x32xf32>,
    %102 = tpu.concatenate %70, %96 in 1 : vector<4x8x8xf32>, vector<4x8x8xf32> -> vector<4x16x8xf32>
    %c0_30 = arith.constant 0 : index
    %c0_31 = arith.constant 0 : index
    %c0_32 = arith.constant 0 : index
    %c0_33 = arith.constant 0 : index
    %103 = vector.load %arg6[%c0_30, %c0_31, %c0_32, %c0_33] : memref<1x4x8x32xf32, #tpu.memory_space<vmem>>, vector<1x4x8x32xf32>
    %104 = vector.shape_cast %103 : vector<1x4x8x32xf32> to vector<4x8x32xf32>
    "tpu.trace_start"() <{level = 10 : i32, message = "htd,hdc->htc"}> : () -> ()
    %cst_34 = arith.constant dense<0.000000e+00> : vector<4x16x32xf32>
    %105 = tpu.matmul %102, %104, %cst_34 {dimension_numbers = #tpu.dot_dimension_numbers<[2], [1], [1], [2], [0, 0, 0, 1, 1, 2], [0], [0]>} : vector<4x16x8xf32>, vector<4x8x32xf32>, vector<4x16x32xf32> -> vector<4x16x32xf32>
    "tpu.trace_stop"() : () -> ()
    %cst_35 = arith.constant dense<0.000000e+00> : vector<16x32xf32>
    %106 = vector.multi_reduction <add>, %105, %cst_35 [0] : vector<4x16x32xf32> to vector<16x32xf32>
    %107 = arith.addf %3, %106 : vector<16x32xf32>
    %108 = vector.broadcast %8 : vector<1x32xf32> to vector<16x32xf32>
    %109 = arith.addf %107, %108 : vector<16x32xf32>
    %cst_36 = arith.constant dense<0.000000e+00> : vector<16xf32>
    %110 = vector.multi_reduction <add>, %109, %cst_36 [1] : vector<16x32xf32> to vector<16xf32>
    %111 = vector.shape_cast %110 : vector<16xf32> to vector<16x1xf32>
    %cst_37 = arith.constant 3.200000e+01 : f32
    %112 = vector.broadcast %cst_37 : f32 to vector<16x1xf32>
    %113 = arith.divf %111, %112 : vector<16x1xf32>
    %114 = vector.broadcast %113 : vector<16x1xf32> to vector<16x32xf32>
    %115 = arith.subf %109, %114 : vector<16x32xf32>
    %116 = arith.mulf %115, %115 : vector<16x32xf32>
    %cst_38 = arith.constant dense<0.000000e+00> : vector<16xf32>
    %117 = vector.multi_reduction <add>, %116, %cst_38 [1] : vector<16x32xf32> to vector<16xf32>
    %118 = vector.shape_cast %117 : vector<16xf32> to vector<16x1xf32>
    %cst_39 = arith.constant 3.200000e+01 : f32
    %119 = vector.broadcast %cst_39 : f32 to vector<16x1xf32>
    %120 = arith.divf %118, %119 : vector<16x1xf32>
    %121 = vector.broadcast %113 : vector<16x1xf32> to vector<16x32xf32>
    %122 = arith.subf %109, %121 : vector<16x32xf32>
    %cst_40 = arith.constant 9.99999974E-6 : f32
    %123 = vector.broadcast %cst_40 : f32 to vector<16x1xf32>
    %124 = arith.addf %120, %123 : vector<16x1xf32>
    %125 = math.rsqrt %124 : vector<16x1xf32>
    %126 = vector.broadcast %125 : vector<16x1xf32> to vector<16x32xf32>
    %127 = arith.mulf %122, %126 : vector<16x32xf32>
    %128 = vector.broadcast %9 : vector<1x32xf32> to vector<16x32xf32>
    %129 = arith.mulf %127, %128 : vector<16x32xf32>
    %130 = vector.broadcast %10 : vector<1x32xf32> to vector<16x32xf32>
    %131 = arith.addf %129, %130 : vector<16x32xf32>
    %c0_41 = arith.constant 0 : index
    %c0_42 = arith.constant 0 : index
    %c0_43 = arith.constant 0 : index
    %132 = vector.load %arg7[%c0_41, %c0_42, %c0_43] : memref<1x32x128xf32, #tpu.memory_space<vmem>>, vector<1x32x128xf32>
    %133 = vector.shape_cast %132 : vector<1x32x128xf32> to vector<32x128xf32>
    %cst_44 = arith.constant dense<0.000000e+00> : vector<16x128xf32>
    %134 = tpu.matmul %131, %133, %cst_44 {dimension_numbers = #tpu.dot_dimension_numbers<[1], [0], [0], [1], [0, 0, 1, 1], [], []>} : vector<16x32xf32>, vector<32x128xf32>, vector<16x128xf32> -> vector<16x128xf32>
    %c0_45 = arith.constant 0 : index
    %c0_46 = arith.constant 0 : index
    %c0_47 = arith.constant 0 : index
    %135 = vector.load %arg8[%c0_45, %c0_46, %c0_47] : memref<1x1x128xf32, #tpu.memory_space<vmem>>, vector<1x1x128xf32>
    %136 = vector.shape_cast %135 : vector<1x1x128xf32> to vector<1x128xf32>
    %137 = vector.broadcast %136 : vector<1x128xf32> to vector<16x128xf32>
    %138 = arith.addf %134, %137 : vector<16x128xf32>
    %cst_48 = arith.constant 0.000000e+00 : f32
    %139 = vector.broadcast %cst_48 : f32 to vector<16x128xf32>
    %140 = arith.maximumf %138, %139 : vector<16x128xf32>
    %c0_49 = arith.constant 0 : index
    %c0_50 = arith.constant 0 : index
    %c0_51 = arith.constant 0 : index
    %141 = vector.load %arg9[%c0_49, %c0_50, %c0_51] : memref<1x128x32xf32, #tpu.memory_space<vmem>>, vector<1x128x32xf32>
    %142 = vector.shape_cast %141 : vector<1x128x32xf32> to vector<128x32xf32>
    %cst_52 = arith.constant dense<0.000000e+00> : vector<16x32xf32>
    %143 = tpu.matmul %140, %142, %cst_52 {dimension_numbers = #tpu.dot_dimension_numbers<[1], [0], [0], [1], [0, 0, 1, 1], [], []>} : vector<16x128xf32>, vector<128x32xf32>, vector<16x32xf32> -> vector<16x32xf32>
    %144 = arith.addf %109, %143 : vector<16x32xf32>
    %145 = vector.broadcast %11 : vector<1x32xf32> to vector<16x32xf32>
    %146 = arith.addf %144, %145 : vector<16x32xf32>
    %c1_i32 = arith.constant 1 : i32
    %147 = arith.cmpi slt, %arg0, %c1_i32 : i32
    %148 = arith.extui %147 : i1 to i32
    %c0_i32_53 = arith.constant 0 : i32
    %149 = arith.cmpi ne, %148, %c0_i32_53 : i32
    scf.if %149 {
      %c0_56 = arith.constant 0 : index
      %c0_57 = arith.constant 0 : index
      %153 = vector.load %arg12[%c0_56, %c0_57] : memref<16x32xf32, #tpu.memory_space<vmem>>, vector<16x32xf32>
      tpu.vector_store %arg12[%c0_56, %c0_57], %146 {strides = array<i32>} : memref<16x32xf32, #tpu.memory_space<vmem>>, vector<16x32xf32>,
    } else {
    }
    %c1_i32_54 = arith.constant 1 : i32
    %150 = arith.cmpi eq, %arg0, %c1_i32_54 : i32
    %151 = arith.extui %150 : i1 to i32
    %c0_i32_55 = arith.constant 0 : i32
    %152 = arith.cmpi ne, %151, %c0_i32_55 : i32
    scf.if %152 {
      %c0_56 = arith.constant 0 : index
      %c0_57 = arith.constant 0 : index
      %153 = vector.load %arg10[%c0_56, %c0_57] : memref<1x32xf32, #tpu.memory_space<vmem>>, vector<1x32xf32>
      %c0_58 = arith.constant 0 : index
      %c0_59 = arith.constant 0 : index
      %154 = vector.load %arg11[%c0_58, %c0_59] : memref<1x32xf32, #tpu.memory_space<vmem>>, vector<1x32xf32>
      %cst_60 = arith.constant dense<0.000000e+00> : vector<16xf32>
      %155 = vector.multi_reduction <add>, %146, %cst_60 [1] : vector<16x32xf32> to vector<16xf32>
      %156 = vector.shape_cast %155 : vector<16xf32> to vector<16x1xf32>
      %cst_61 = arith.constant 3.200000e+01 : f32
      %157 = vector.broadcast %cst_61 : f32 to vector<16x1xf32>
      %158 = arith.divf %156, %157 : vector<16x1xf32>
      %159 = vector.broadcast %158 : vector<16x1xf32> to vector<16x32xf32>
      %160 = arith.subf %146, %159 : vector<16x32xf32>
      %161 = arith.mulf %160, %160 : vector<16x32xf32>
      %cst_62 = arith.constant dense<0.000000e+00> : vector<16xf32>
      %162 = vector.multi_reduction <add>, %161, %cst_62 [1] : vector<16x32xf32> to vector<16xf32>
      %163 = vector.shape_cast %162 : vector<16xf32> to vector<16x1xf32>
      %cst_63 = arith.constant 3.200000e+01 : f32
      %164 = vector.broadcast %cst_63 : f32 to vector<16x1xf32>
      %165 = arith.divf %163, %164 : vector<16x1xf32>
      %166 = vector.broadcast %158 : vector<16x1xf32> to vector<16x32xf32>
      %167 = arith.subf %146, %166 : vector<16x32xf32>
      %cst_64 = arith.constant 9.99999974E-6 : f32
      %168 = vector.broadcast %cst_64 : f32 to vector<16x1xf32>
      %169 = arith.addf %165, %168 : vector<16x1xf32>
      %170 = math.rsqrt %169 : vector<16x1xf32>
      %171 = vector.broadcast %170 : vector<16x1xf32> to vector<16x32xf32>
      %172 = arith.mulf %167, %171 : vector<16x32xf32>
      %173 = vector.broadcast %153 : vector<1x32xf32> to vector<16x32xf32>
      %174 = arith.mulf %172, %173 : vector<16x32xf32>
      %175 = vector.broadcast %154 : vector<1x32xf32> to vector<16x32xf32>
      %176 = arith.addf %174, %175 : vector<16x32xf32>
      %c0_65 = arith.constant 0 : index
      %c0_66 = arith.constant 0 : index
      %177 = vector.load %arg12[%c0_65, %c0_66] : memref<16x32xf32, #tpu.memory_space<vmem>>, vector<16x32xf32>
      tpu.vector_store %arg12[%c0_65, %c0_66], %176 {strides = array<i32>} : memref<16x32xf32, #tpu.memory_space<vmem>>, vector<16x32xf32>,
    } else {
    }
    return
  }
  func.func @transform_0(%arg0: i32) -> (i32, i32) {
    %c0_i32 = arith.constant 0 : i32
    %c0_i32_0 = arith.constant 0 : i32
    %c0_i32_1 = arith.constant 0 : i32
    return %c0_i32, %c0_i32_0 : i32, i32
  }
  func.func @transform_1(%arg0: i32) -> (i32, i32) {
    %c0_i32 = arith.constant 0 : i32
    %c0_i32_0 = arith.constant 0 : i32
    %c0_i32_1 = arith.constant 0 : i32
    return %c0_i32, %c0_i32_0 : i32, i32
  }
  func.func @transform_2(%arg0: i32) -> (i32, i32) {
    %c0_i32 = arith.constant 0 : i32
    %c0_i32_0 = arith.constant 0 : i32
    %c0_i32_1 = arith.constant 0 : i32
    return %c0_i32, %c0_i32_0 : i32, i32
  }
  func.func @transform_3(%arg0: i32) -> (i32, i32, i32) {
    %c0_i32 = arith.constant 0 : i32
    %c0_i32_0 = arith.constant 0 : i32
    %c0_i32_1 = arith.constant 0 : i32
    return %arg0, %c0_i32, %c0_i32_0 : i32, i32, i32
  }
  func.func @transform_4(%arg0: i32) -> (i32, i32, i32, i32) {
    %c0_i32 = arith.constant 0 : i32
    %c0_i32_0 = arith.constant 0 : i32
    %c0_i32_1 = arith.constant 0 : i32
    %c0_i32_2 = arith.constant 0 : i32
    return %arg0, %c0_i32, %c0_i32_0, %c0_i32_1 : i32, i32, i32, i32
  }
  func.func @transform_5(%arg0: i32) -> (i32, i32, i32, i32) {
    %c0_i32 = arith.constant 0 : i32
    %c0_i32_0 = arith.constant 0 : i32
    %c0_i32_1 = arith.constant 0 : i32
    %c0_i32_2 = arith.constant 0 : i32
    return %arg0, %c0_i32, %c0_i32_0, %c0_i32_1 : i32, i32, i32, i32
  }
  func.func @transform_6(%arg0: i32) -> (i32, i32, i32) {
    %c0_i32 = arith.constant 0 : i32
    %c0_i32_0 = arith.constant 0 : i32
    %c0_i32_1 = arith.constant 0 : i32
    return %arg0, %c0_i32, %c0_i32_0 : i32, i32, i32
  }
  func.func @transform_7(%arg0: i32) -> (i32, i32, i32) {
    %c0_i32 = arith.constant 0 : i32
    %c0_i32_0 = arith.constant 0 : i32
    %c0_i32_1 = arith.constant 0 : i32
    return %arg0, %c0_i32, %c0_i32_0 : i32, i32, i32
  }
  func.func @transform_8(%arg0: i32) -> (i32, i32, i32) {
    %c0_i32 = arith.constant 0 : i32
    %c0_i32_0 = arith.constant 0 : i32
    %c0_i32_1 = arith.constant 0 : i32
    return %arg0, %c0_i32, %c0_i32_0 : i32, i32, i32
  }
  func.func @transform_9(%arg0: i32) -> (i32, i32) {
    %c0_i32 = arith.constant 0 : i32
    %c0_i32_0 = arith.constant 0 : i32
    %c0_i32_1 = arith.constant 0 : i32
    return %c0_i32, %c0_i32_0 : i32, i32
  }
  func.func @transform_10(%arg0: i32) -> (i32, i32) {
    %c0_i32 = arith.constant 0 : i32
    %c0_i32_0 = arith.constant 0 : i32
    %c0_i32_1 = arith.constant 0 : i32
    return %c0_i32, %c0_i32_0 : i32, i32
  }
  func.func @transform_11(%arg0: i32) -> (i32, i32) {
    %c0_i32 = arith.constant 0 : i32
    %c0_i32_0 = arith.constant 0 : i32
    %c0_i32_1 = arith.constant 0 : i32
    return %c0_i32, %c0_i32_0 : i32, i32
  }
  func.func @transform_12(%arg0: i32) -> (i32, i32, i32, i32) {
    %c0_i32 = arith.constant 0 : i32
    %c0_i32_0 = arith.constant 0 : i32
    %c0_i32_1 = arith.constant 0 : i32
    %c0_i32_2 = arith.constant 0 : i32
    return %arg0, %c0_i32, %c0_i32_0, %c0_i32_1 : i32, i32, i32, i32
  }
}

</mosaic_0001>

<llo_original>
// kernel: squeeze.3
$region0: #{squeeze.3}
  %s0 = inlined_call_operand.vmem [shape: f32[1,2,8,32], index: 0, kind: input, shape index: {}]
  %s1 = inlined_call_operand.vmem [shape: f32[2,8,4,8], index: 1, kind: output, shape index: {}]
  $region1: #{squeeze.3} parent=0
    #allocation0 [shape = 'u8[65536]{0}', space=vmem, size = 0x10000, scoped, tag = 'scoped mem for output reshape']
    %v2 = vld [vmem:[%s0] sm:$0xff]
    %vm3 = vcmask 64512
    %4 = vst.msk [vmem:[#allocation0] ss:$8 sm:$0xf] %vm3, %v2
    %5 = vst.msk [vmem:[#allocation0] ss:$8 sm:$0xf0] %vm3, %v2
    %s6 = scalar_lea.vmem %s0, 8
    %v7 = vld [vmem:[%s6] sm:$0xff]
    %vm8 = vcmask 64512
    %s9 = scalar_lea.vmem [#allocation0], 64
    %10 = vst.msk [vmem:[%s9] ss:$8 sm:$0xf] %vm8, %v7
    %s11 = scalar_lea.vmem [#allocation0], 64
    %12 = vst.msk [vmem:[%s11] ss:$8 sm:$0xf0] %vm8, %v7
    %v13 = vld [vmem:[%s0] sm:$0xff]
    %14 = vrot.lane.b32.xlu0 %v13, 120
    %v15 = vpop.permute.xlu0 %14
    %vm16 = vcmask 64512
    %s17 = scalar_lea.vmem [#allocation0], 1
    %18 = vst.msk [vmem:[%s17] ss:$8 sm:$0xf] %vm16, %v15
    %s19 = scalar_lea.vmem [#allocation0], 1
    %20 = vst.msk [vmem:[%s19] ss:$8 sm:$0xf0] %vm16, %v15
    %s21 = scalar_lea.vmem %s0, 8
    %v22 = vld [vmem:[%s21] sm:$0xff]
    %23 = vrot.lane.b32.xlu0 %v22, 120
    %v24 = vpop.permute.xlu0 %23
    %vm25 = vcmask 64512
    %s26 = scalar_lea.vmem [#allocation0], 65
    %27 = vst.msk [vmem:[%s26] ss:$8 sm:$0xf] %vm25, %v24
    %s28 = scalar_lea.vmem [#allocation0], 65
    %29 = vst.msk [vmem:[%s28] ss:$8 sm:$0xf0] %vm25, %v24
    %v30 = vld [vmem:[%s0] sm:$0xff]
    %31 = vrot.lane.b32.xlu0 %v30, 112
    %v32 = vpop.permute.xlu0 %31
    %vm33 = vcmask 64512
    %s34 = scalar_lea.vmem [#allocation0], 2
    %35 = vst.msk [vmem:[%s34] ss:$8 sm:$0xf] %vm33, %v32
    %s36 = scalar_lea.vmem [#allocation0], 2
    %37 = vst.msk [vmem:[%s36] ss:$8 sm:$0xf0] %vm33, %v32
    %s38 = scalar_lea.vmem %s0, 8
    %v39 = vld [vmem:[%s38] sm:$0xff]
    %40 = vrot.lane.b32.xlu0 %v39, 112
    %v41 = vpop.permute.xlu0 %40
    %vm42 = vcmask 64512
    %s43 = scalar_lea.vmem [#allocation0], 66
    %44 = vst.msk [vmem:[%s43] ss:$8 sm:$0xf] %vm42, %v41
    %s45 = scalar_lea.vmem [#allocation0], 66
    %46 = vst.msk [vmem:[%s45] ss:$8 sm:$0xf0] %vm42, %v41
    %v47 = vld [vmem:[%s0] sm:$0xff]
    %48 = vrot.lane.b32.xlu0 %v47, 104
    %v49 = vpop.permute.xlu0 %48
    %vm50 = vcmask 64512
    %s51 = scalar_lea.vmem [#allocation0], 3
    %52 = vst.msk [vmem:[%s51] ss:$8 sm:$0xf] %vm50, %v49
    %s53 = scalar_lea.vmem [#allocation0], 3
    %54 = vst.msk [vmem:[%s53] ss:$8 sm:$0xf0] %vm50, %v49
    %s55 = scalar_lea.vmem %s0, 8
    %v56 = vld [vmem:[%s55] sm:$0xff]
    %57 = vrot.lane.b32.xlu0 %v56, 104
    %v58 = vpop.permute.xlu0 %57
    %vm59 = vcmask 64512
    %s60 = scalar_lea.vmem [#allocation0], 67
    %61 = vst.msk [vmem:[%s60] ss:$8 sm:$0xf] %vm59, %v58
    %s62 = scalar_lea.vmem [#allocation0], 67
    %63 = vst.msk [vmem:[%s62] ss:$8 sm:$0xf0] %vm59, %v58
    %s65 = ssub.s32 16, 1
    %v66 = vld [vmem:[#allocation0] sm:%s65]
    %s68 = ssub.s32 16, 1
    %69 = vst [vmem:[%s1] sm:%s68] %v66
    %s70 = scalar_lea.vmem [#allocation0], 8
    %v71 = vld [vmem:[%s70] sm:%s65]
    %s73 = ssub.s32 16, 1
    %s74 = scalar_lea.vmem %s1, 4
    %75 = vst [vmem:[%s74] sm:%s73] %v71
    %s76 = scalar_lea.vmem [#allocation0], 16
    %v77 = vld [vmem:[%s76] sm:%s65]
    %s79 = ssub.s32 16, 1
    %s80 = scalar_lea.vmem %s1, 8
    %81 = vst [vmem:[%s80] sm:%s79] %v77
    %s82 = scalar_lea.vmem [#allocation0], 24
    %v83 = vld [vmem:[%s82] sm:%s65]
    %s85 = ssub.s32 16, 1
    %s86 = scalar_lea.vmem %s1, 12
    %87 = vst [vmem:[%s86] sm:%s85] %v83
    %s88 = scalar_lea.vmem [#allocation0], 32
    %v89 = vld [vmem:[%s88] sm:%s65]
    %s91 = ssub.s32 16, 1
    %s92 = scalar_lea.vmem %s1, 16
    %93 = vst [vmem:[%s92] sm:%s91] %v89
    %s94 = scalar_lea.vmem [#allocation0], 40
    %v95 = vld [vmem:[%s94] sm:%s65]
    %s97 = ssub.s32 16, 1
    %s98 = scalar_lea.vmem %s1, 20
    %99 = vst [vmem:[%s98] sm:%s97] %v95
    %s100 = scalar_lea.vmem [#allocation0], 48
    %v101 = vld [vmem:[%s100] sm:%s65]
    %s103 = ssub.s32 16, 1
    %s104 = scalar_lea.vmem %s1, 24
    %105 = vst [vmem:[%s104] sm:%s103] %v101
    %s106 = scalar_lea.vmem [#allocation0], 56
    %v107 = vld [vmem:[%s106] sm:%s65]
    %s109 = ssub.s32 16, 1
    %s110 = scalar_lea.vmem %s1, 28
    %111 = vst [vmem:[%s110] sm:%s109] %v107
    %s112 = scalar_lea.vmem [#allocation0], 64
    %v113 = vld [vmem:[%s112] sm:%s65]
    %s115 = ssub.s32 16, 1
    %s116 = scalar_lea.vmem %s1, 32
    %117 = vst [vmem:[%s116] sm:%s115] %v113
    %s118 = scalar_lea.vmem [#allocation0], 72
    %v119 = vld [vmem:[%s118] sm:%s65]
    %s121 = ssub.s32 16, 1
    %s122 = scalar_lea.vmem %s1, 36
    %123 = vst [vmem:[%s122] sm:%s121] %v119
    %s124 = scalar_lea.vmem [#allocation0], 80
    %v125 = vld [vmem:[%s124] sm:%s65]
    %s127 = ssub.s32 16, 1
    %s128 = scalar_lea.vmem %s1, 40
    %129 = vst [vmem:[%s128] sm:%s127] %v125
    %s130 = scalar_lea.vmem [#allocation0], 88
    %v131 = vld [vmem:[%s130] sm:%s65]
    %s133 = ssub.s32 16, 1
    %s134 = scalar_lea.vmem %s1, 44
    %135 = vst [vmem:[%s134] sm:%s133] %v131
    %s136 = scalar_lea.vmem [#allocation0], 96
    %v137 = vld [vmem:[%s136] sm:%s65]
    %s139 = ssub.s32 16, 1
    %s140 = scalar_lea.vmem %s1, 48
    %141 = vst [vmem:[%s140] sm:%s139] %v137
    %s142 = scalar_lea.vmem [#allocation0], 104
    %v143 = vld [vmem:[%s142] sm:%s65]
    %s145 = ssub.s32 16, 1
    %s146 = scalar_lea.vmem %s1, 52
    %147 = vst [vmem:[%s146] sm:%s145] %v143
    %s148 = scalar_lea.vmem [#allocation0], 112
    %v149 = vld [vmem:[%s148] sm:%s65]
    %s151 = ssub.s32 16, 1
    %s152 = scalar_lea.vmem %s1, 56
    %153 = vst [vmem:[%s152] sm:%s151] %v149
    %s154 = scalar_lea.vmem [#allocation0], 120
    %v155 = vld [vmem:[%s154] sm:%s65]
    %s157 = ssub.s32 16, 1
    %s158 = scalar_lea.vmem %s1, 60
    %159 = vst [vmem:[%s158] sm:%s157] %v155

// kernel: encoder_forward.1
$region0: #{encoder_forward.1}
  #allocation0 [shape = 'u32[]', space=smem, size = 0x4, offset = 0x4, fixed_abs, tag = 'smem constant byte address 0x4 - core index']
  #allocation1 [shape = 'u32[72,128]{1,0:T(1,128)}', space=vmem, size = 0x9000, scoped, tag = 'internal scratch']
  %s0 = inlined_call_operand.vmem [shape: s32[16,1], index: 0, kind: input, shape index: {}]
  %s1 = inlined_call_operand.vmem [shape: f32[32,32], index: 1, kind: input, shape index: {}]
  %s2 = inlined_call_operand.vmem [shape: f32[8,32], index: 2, kind: input, shape index: {}]
  %s3 = inlined_call_operand.vmem [shape: f32[2,6,32], index: 3, kind: input, shape index: {}]
  %s4 = inlined_call_operand.vmem [shape: f32[2,12,32,8], index: 4, kind: input, shape index: {}]
  %s5 = inlined_call_operand.vmem [shape: f32[2,4,8,32], index: 5, kind: input, shape index: {}]
  %s6 = inlined_call_operand.vmem [shape: f32[2,32,128], index: 6, kind: input, shape index: {}]
  %s7 = inlined_call_operand.vmem [shape: f32[2,1,128], index: 7, kind: input, shape index: {}]
  %s8 = inlined_call_operand.vmem [shape: f32[2,128,32], index: 8, kind: input, shape index: {}]
  %s9 = inlined_call_operand.vmem [shape: f32[1,32], index: 9, kind: input, shape index: {}]
  %s10 = inlined_call_operand.vmem [shape: f32[1,32], index: 10, kind: input, shape index: {}]
  %s11 = inlined_call_operand.hbm [shape: f32[16,32], index: 11, kind: output, shape index: {0}]
  %s12 = inlined_call_operand.vmem [shape: f32[2,2,8,32], index: 12, kind: output, shape index: {1}]
  %13 = xla_tuple %s11, %s12
  %s14 = sld [smem:[#allocation0]]
  $region97: #{encoder_forward.1} parent=0
    _
  %s16 = ssub.s32 1, %s14
  %s17 = scalar_select 0, %s16, %s14
  $region1: #{encoder_forward.1} parent=0
    #allocation2 [shape = 'u8[8192]{0}', space=vmem, size = 0x2000, scoped, tag = 'output window, operand 0, single buffered']
    #allocation3 [shape = 's32[2]{0}', space=sflag, size = 0x8, scoped, tag = 'scoped memory for encoder_forward.1']
    %18 = vsyncpa [#allocation3], 0
    loop: start=0, step=1, limit=4
    $region2: #{encoder_forward.1} parent=1 // loop_pre_header
      _
    $region3: #{encoder_forward.1} parent=1 // loop_header
      %s20 = sphi 0, %s24
      %p21 = scmp.ge.s32.totalorder %s20, 4
      %s28 = sphi 0, %s28
      %s30 = sphi 0, %s28
      %s31 = sphi 0, %s30
      %s45 = sphi 0, %s31
      %s49 = sphi 0, %s49
      %s51 = sphi 0, %s49
      %s52 = sphi 0, %s51
      %s66 = sphi 0, %s52
      %s70 = sphi 0, %s70
      %s72 = sphi 0, %s70
      %s73 = sphi 0, %s72
      %s87 = sphi 0, %s73
      %s93 = sphi 0, %s95
      %s96 = sphi 0, %s93
      %s97 = sphi 0, %s96
      %s113 = sphi 0, %s97
      %s119 = sphi 0, %s121
      %s122 = sphi 0, %s119
      %s123 = sphi 0, %s122
      %s139 = sphi 0, %s123
      %s145 = sphi 0, %s147
      %s148 = sphi 0, %s145
      %s149 = sphi 0, %s148
      %s165 = sphi 0, %s149
      %s171 = sphi 0, %s173
      %s174 = sphi 0, %s171
      %s175 = sphi 0, %s174
      %s191 = sphi 0, %s175
      %s197 = sphi 0, %s199
      %s200 = sphi 0, %s197
      %s201 = sphi 0, %s200
      %s217 = sphi 0, %s201
      %s223 = sphi 0, %s225
      %s226 = sphi 0, %s223
      %s227 = sphi 0, %s226
      %s243 = sphi 0, %s227
      %s247 = sphi 0, %s247
      %s249 = sphi 0, %s247
      %s250 = sphi 0, %s249
      %s264 = sphi 0, %s250
      %s268 = sphi 0, %s268
      %s270 = sphi 0, %s268
      %s271 = sphi 0, %s270
      %s285 = sphi 0, %s271
      %s289 = sphi 0, %s289
      %s291 = sphi 0, %s289
      %s292 = sphi 0, %s291
      %s306 = sphi 0, %s292
      %s312 = sphi 0, %s314
      %s315 = sphi 0, %s312
      %s316 = sphi 0, %s315
      %s332 = sphi 0, %s316
    $region4: #{encoder_forward.1} parent=1 // loop_header_branch
      %23 = sbr.rel (%p21) target = $region8
    $region5: #{encoder_forward.1} parent=1 // loop_body
      %s25 = ssub.s32 %s20, 1
      %s26 = ssub.s32 %s20, 2
      %s27 = sadd.s32 %s20, 1
      %s29 = sadd.s32 %s28, 1
      %p32 = scmp.eq.s32.totalorder %s20, 1
      %p33 = scmp.ne.s32.totalorder %s28, %s30
      %p34 = scmp.eq.s32.totalorder %s20, 0
      %p35 = por %p33, %p34
      %p36 = scmp.ne.s32.totalorder %s28, %s30
      %p37 = scmp.eq.s32.totalorder %s25, 1
      %p38 = por %p36, %p37
      %p39 = scmp.ne.s32.totalorder %s30, %s31
      %p40 = scmp.eq.s32.totalorder %s25, 0
      %p41 = por %p39, %p40
      %p42 = scmp.ne.s32.totalorder %s30, %s31
      %p43 = scmp.eq.s32.totalorder %s26, 1
      %p44 = por %p42, %p43
      %p46 = scmp.ne.s32.totalorder %s31, %s45
      %p47 = scmp.eq.s32.totalorder %s26, 0
      %p48 = por %p46, %p47
      %s50 = sadd.s32 %s49, 1
      %p53 = scmp.eq.s32.totalorder %s20, 1
      %p54 = scmp.ne.s32.totalorder %s49, %s51
      %p55 = scmp.eq.s32.totalorder %s20, 0
      %p56 = por %p54, %p55
      %p57 = scmp.ne.s32.totalorder %s49, %s51
      %p58 = scmp.eq.s32.totalorder %s25, 1
      %p59 = por %p57, %p58
      %p60 = scmp.ne.s32.totalorder %s51, %s52
      %p61 = scmp.eq.s32.totalorder %s25, 0
      %p62 = por %p60, %p61
      %p63 = scmp.ne.s32.totalorder %s51, %s52
      %p64 = scmp.eq.s32.totalorder %s26, 1
      %p65 = por %p63, %p64
      %p67 = scmp.ne.s32.totalorder %s52, %s66
      %p68 = scmp.eq.s32.totalorder %s26, 0
      %p69 = por %p67, %p68
      %s71 = sadd.s32 %s70, 1
      %p74 = scmp.eq.s32.totalorder %s20, 1
      %p75 = scmp.ne.s32.totalorder %s70, %s72
      %p76 = scmp.eq.s32.totalorder %s20, 0
      %p77 = por %p75, %p76
      %p78 = scmp.ne.s32.totalorder %s70, %s72
      %p79 = scmp.eq.s32.totalorder %s25, 1
      %p80 = por %p78, %p79
      %p81 = scmp.ne.s32.totalorder %s72, %s73
      %p82 = scmp.eq.s32.totalorder %s25, 0
      %p83 = por %p81, %p82
      %p84 = scmp.ne.s32.totalorder %s72, %s73
      %p85 = scmp.eq.s32.totalorder %s26, 1
      %p86 = por %p84, %p85
      %p88 = scmp.ne.s32.totalorder %s73, %s87
      %p89 = scmp.eq.s32.totalorder %s26, 0
      %p90 = por %p88, %p89
      %s91 = ssub.s32 %s20, %s27
      %p92 = scmp.eq.s32.totalorder %s91, 0
      %s94 = sadd.s32 %s93, 1
      %s95 = scalar_select %p92, %s93, %s94
      %p98 = pneg %p92
      %p99 = scmp.eq.s32.totalorder %s20, 1
      %p100 = por %p98, %p99
      %p101 = scmp.ne.s32.totalorder %s93, %s96
      %p102 = scmp.eq.s32.totalorder %s20, 0
      %p103 = por %p101, %p102
      %p104 = scmp.ne.s32.totalorder %s93, %s96
      %p105 = scmp.eq.s32.totalorder %s25, 1
      %p106 = por %p104, %p105
      %p107 = scmp.ne.s32.totalorder %s96, %s97
      %p108 = scmp.eq.s32.totalorder %s25, 0
      %p109 = por %p107, %p108
      %p110 = scmp.ne.s32.totalorder %s96, %s97
      %p111 = scmp.eq.s32.totalorder %s26, 1
      %p112 = por %p110, %p111
      %p114 = scmp.ne.s32.totalorder %s97, %s113
      %p115 = scmp.eq.s32.totalorder %s26, 0
      %p116 = por %p114, %p115
      %s117 = ssub.s32 %s20, %s27
      %p118 = scmp.eq.s32.totalorder %s117, 0
      %s120 = sadd.s32 %s119, 1
      %s121 = scalar_select %p118, %s119, %s120
      %p124 = pneg %p118
      %p125 = scmp.eq.s32.totalorder %s20, 1
      %p126 = por %p124, %p125
      %p127 = scmp.ne.s32.totalorder %s119, %s122
      %p128 = scmp.eq.s32.totalorder %s20, 0
      %p129 = por %p127, %p128
      %p130 = scmp.ne.s32.totalorder %s119, %s122
      %p131 = scmp.eq.s32.totalorder %s25, 1
      %p132 = por %p130, %p131
      %p133 = scmp.ne.s32.totalorder %s122, %s123
      %p134 = scmp.eq.s32.totalorder %s25, 0
      %p135 = por %p133, %p134
      %p136 = scmp.ne.s32.totalorder %s122, %s123
      %p137 = scmp.eq.s32.totalorder %s26, 1
      %p138 = por %p136, %p137
      %p140 = scmp.ne.s32.totalorder %s123, %s139
      %p141 = scmp.eq.s32.totalorder %s26, 0
      %p142 = por %p140, %p141
      %s143 = ssub.s32 %s20, %s27
      %p144 = scmp.eq.s32.totalorder %s143, 0
      %s146 = sadd.s32 %s145, 1
      %s147 = scalar_select %p144, %s145, %s146
      %p150 = pneg %p144
      %p151 = scmp.eq.s32.totalorder %s20, 1
      %p152 = por %p150, %p151
      %p153 = scmp.ne.s32.totalorder %s145, %s148
      %p154 = scmp.eq.s32.totalorder %s20, 0
      %p155 = por %p153, %p154
      %p156 = scmp.ne.s32.totalorder %s145, %s148
      %p157 = scmp.eq.s32.totalorder %s25, 1
      %p158 = por %p156, %p157
      %p159 = scmp.ne.s32.totalorder %s148, %s149
      %p160 = scmp.eq.s32.totalorder %s25, 0
      %p161 = por %p159, %p160
      %p162 = scmp.ne.s32.totalorder %s148, %s149
      %p163 = scmp.eq.s32.totalorder %s26, 1
      %p164 = por %p162, %p163
      %p166 = scmp.ne.s32.totalorder %s149, %s165
      %p167 = scmp.eq.s32.totalorder %s26, 0
      %p168 = por %p166, %p167
      %s169 = ssub.s32 %s20, %s27
      %p170 = scmp.eq.s32.totalorder %s169, 0
      %s172 = sadd.s32 %s171, 1
      %s173 = scalar_select %p170, %s171, %s172
      %p176 = pneg %p170
      %p177 = scmp.eq.s32.totalorder %s20, 1
      %p178 = por %p176, %p177
      %p179 = scmp.ne.s32.totalorder %s171, %s174
      %p180 = scmp.eq.s32.totalorder %s20, 0
      %p181 = por %p179, %p180
      %p182 = scmp.ne.s32.totalorder %s171, %s174
      %p183 = scmp.eq.s32.totalorder %s25, 1
      %p184 = por %p182, %p183
      %p185 = scmp.ne.s32.totalorder %s174, %s175
      %p186 = scmp.eq.s32.totalorder %s25, 0
      %p187 = por %p185, %p186
      %p188 = scmp.ne.s32.totalorder %s174, %s175
      %p189 = scmp.eq.s32.totalorder %s26, 1
      %p190 = por %p188, %p189
      %p192 = scmp.ne.s32.totalorder %s175, %s191
      %p193 = scmp.eq.s32.totalorder %s26, 0
      %p194 = por %p192, %p193
      %s195 = ssub.s32 %s20, %s27
      %p196 = scmp.eq.s32.totalorder %s195, 0
      %s198 = sadd.s32 %s197, 1
      %s199 = scalar_select %p196, %s197, %s198
      %p202 = pneg %p196
      %p203 = scmp.eq.s32.totalorder %s20, 1
      %p204 = por %p202, %p203
      %p205 = scmp.ne.s32.totalorder %s197, %s200
      %p206 = scmp.eq.s32.totalorder %s20, 0
      %p207 = por %p205, %p206
      %p208 = scmp.ne.s32.totalorder %s197, %s200
      %p209 = scmp.eq.s32.totalorder %s25, 1
      %p210 = por %p208, %p209
      %p211 = scmp.ne.s32.totalorder %s200, %s201
      %p212 = scmp.eq.s32.totalorder %s25, 0
      %p213 = por %p211, %p212
      %p214 = scmp.ne.s32.totalorder %s200, %s201
      %p215 = scmp.eq.s32.totalorder %s26, 1
      %p216 = por %p214, %p215
      %p218 = scmp.ne.s32.totalorder %s201, %s217
      %p219 = scmp.eq.s32.totalorder %s26, 0
      %p220 = por %p218, %p219
      %s221 = ssub.s32 %s20, %s27
      %p222 = scmp.eq.s32.totalorder %s221, 0
      %s224 = sadd.s32 %s223, 1
      %s225 = scalar_select %p222, %s223, %s224
      %p228 = pneg %p222
      %p229 = scmp.eq.s32.totalorder %s20, 1
      %p230 = por %p228, %p229
      %p231 = scmp.ne.s32.totalorder %s223, %s226
      %p232 = scmp.eq.s32.totalorder %s20, 0
      %p233 = por %p231, %p232
      %p234 = scmp.ne.s32.totalorder %s223, %s226
      %p235 = scmp.eq.s32.totalorder %s25, 1
      %p236 = por %p234, %p235
      %p237 = scmp.ne.s32.totalorder %s226, %s227
      %p238 = scmp.eq.s32.totalorder %s25, 0
      %p239 = por %p237, %p238
      %p240 = scmp.ne.s32.totalorder %s226, %s227
      %p241 = scmp.eq.s32.totalorder %s26, 1
      %p242 = por %p240, %p241
      %p244 = scmp.ne.s32.totalorder %s227, %s243
      %p245 = scmp.eq.s32.totalorder %s26, 0
      %p246 = por %p244, %p245
      %s248 = sadd.s32 %s247, 1
      %p251 = scmp.eq.s32.totalorder %s20, 1
      %p252 = scmp.ne.s32.totalorder %s247, %s249
      %p253 = scmp.eq.s32.totalorder %s20, 0
      %p254 = por %p252, %p253
      %p255 = scmp.ne.s32.totalorder %s247, %s249
      %p256 = scmp.eq.s32.totalorder %s25, 1
      %p257 = por %p255, %p256
      %p258 = scmp.ne.s32.totalorder %s249, %s250
      %p259 = scmp.eq.s32.totalorder %s25, 0
      %p260 = por %p258, %p259
      %p261 = scmp.ne.s32.totalorder %s249, %s250
      %p262 = scmp.eq.s32.totalorder %s26, 1
      %p263 = por %p261, %p262
      %p265 = scmp.ne.s32.totalorder %s250, %s264
      %p266 = scmp.eq.s32.totalorder %s26, 0
      %p267 = por %p265, %p266
      %s269 = sadd.s32 %s268, 1
      %p272 = scmp.eq.s32.totalorder %s20, 1
      %p273 = scmp.ne.s32.totalorder %s268, %s270
      %p274 = scmp.eq.s32.totalorder %s20, 0
      %p275 = por %p273, %p274
      %p276 = scmp.ne.s32.totalorder %s268, %s270
      %p277 = scmp.eq.s32.totalorder %s25, 1
      %p278 = por %p276, %p277
      %p279 = scmp.ne.s32.totalorder %s270, %s271
      %p280 = scmp.eq.s32.totalorder %s25, 0
      %p281 = por %p279, %p280
      %p282 = scmp.ne.s32.totalorder %s270, %s271
      %p283 = scmp.eq.s32.totalorder %s26, 1
      %p284 = por %p282, %p283
      %p286 = scmp.ne.s32.totalorder %s271, %s285
      %p287 = scmp.eq.s32.totalorder %s26, 0
      %p288 = por %p286, %p287
      %s290 = sadd.s32 %s289, 1
      %p293 = scmp.eq.s32.totalorder %s20, 1
      %p294 = scmp.ne.s32.totalorder %s289, %s291
      %p295 = scmp.eq.s32.totalorder %s20, 0
      %p296 = por %p294, %p295
      %p297 = scmp.ne.s32.totalorder %s289, %s291
      %p298 = scmp.eq.s32.totalorder %s25, 1
      %p299 = por %p297, %p298
      %p300 = scmp.ne.s32.totalorder %s291, %s292
      %p301 = scmp.eq.s32.totalorder %s25, 0
      %p302 = por %p300, %p301
      %p303 = scmp.ne.s32.totalorder %s291, %s292
      %p304 = scmp.eq.s32.totalorder %s26, 1
      %p305 = por %p303, %p304
      %p307 = scmp.ne.s32.totalorder %s292, %s306
      %p308 = scmp.eq.s32.totalorder %s26, 0
      %p309 = por %p307, %p308
      %s310 = ssub.s32 %s20, %s27
      %p311 = scmp.eq.s32.totalorder %s310, 0
      %s313 = sadd.s32 %s312, 1
      %s314 = scalar_select %p311, %s312, %s313
      %p317 = pneg %p311
      %p318 = scmp.eq.s32.totalorder %s20, 1
      %p319 = por %p317, %p318
      %p320 = scmp.ne.s32.totalorder %s312, %s315
      %p321 = scmp.eq.s32.totalorder %s20, 0
      %p322 = por %p320, %p321
      %p323 = scmp.ne.s32.totalorder %s312, %s315
      %p324 = scmp.eq.s32.totalorder %s25, 1
      %p325 = por %p323, %p324
      %p326 = scmp.ne.s32.totalorder %s315, %s316
      %p327 = scmp.eq.s32.totalorder %s25, 0
      %p328 = por %p326, %p327
      %p329 = scmp.ne.s32.totalorder %s315, %s316
      %p330 = scmp.eq.s32.totalorder %s26, 1
      %p331 = por %p329, %p330
      %p333 = scmp.ne.s32.totalorder %s316, %s332
      %p334 = scmp.eq.s32.totalorder %s26, 0
      %p335 = por %p333, %p334
      %p336 = scmp.le.s32.totalorder 1, %s20
      %p337 = scmp.lt.s32.totalorder %s20, 3
      %p338 = pnand %p336, %p337
      %p339 = pneg %p338
      // Predicated region
      $region9: #{encoder_forward.1} parent=5 // pred_check
        _
      $region10: #{encoder_forward.1} parent=5 // pred_check_branch
        %341 = sbr.rel (%p338) target = $region12
      $region11: #{encoder_forward.1} parent=5 // pred_region
        %s342 = ssub.s32 %s20, 1
        // Predicated region
        $region13: #{encoder_forward.1} parent=11 // pred_check
          %p343 = pneg %p41
        $region14: #{encoder_forward.1} parent=11 // pred_check_branch
          %345 = sbr.rel (%p343) target = $region16
        $region15: #{encoder_forward.1} parent=11 // pred_region
          _
        $region16: #{encoder_forward.1} parent=11 // pred_fallthru
          _
        // Predicated region
        $region17: #{encoder_forward.1} parent=11 // pred_check
          %p346 = pneg %p62
        $region18: #{encoder_forward.1} parent=11 // pred_check_branch
          %348 = sbr.rel (%p346) target = $region20
        $region19: #{encoder_forward.1} parent=11 // pred_region
          _
        $region20: #{encoder_forward.1} parent=11 // pred_fallthru
          _
        // Predicated region
        $region21: #{encoder_forward.1} parent=11 // pred_check
          %p349 = pneg %p83
        $region22: #{encoder_forward.1} parent=11 // pred_check_branch
          %351 = sbr.rel (%p349) target = $region24
        $region23: #{encoder_forward.1} parent=11 // pred_region
          _
        $region24: #{encoder_forward.1} parent=11 // pred_fallthru
          _
        // Predicated region
        $region25: #{encoder_forward.1} parent=11 // pred_check
          %p352 = pneg %p260
        $region26: #{encoder_forward.1} parent=11 // pred_check_branch
          %354 = sbr.rel (%p352) target = $region28
        $region27: #{encoder_forward.1} parent=11 // pred_region
          _
        $region28: #{encoder_forward.1} parent=11 // pred_fallthru
          _
        // Predicated region
        $region29: #{encoder_forward.1} parent=11 // pred_check
          %p355 = pneg %p281
        $region30: #{encoder_forward.1} parent=11 // pred_check_branch
          %357 = sbr.rel (%p355) target = $region32
        $region31: #{encoder_forward.1} parent=11 // pred_region
          _
        $region32: #{encoder_forward.1} parent=11 // pred_fallthru
          _
      $region12: #{encoder_forward.1} parent=5 // pred_fallthru
        _
      %p358 = scmp.lt.s32.totalorder %s20, 2
      // Predicated region
      $region33: #{encoder_forward.1} parent=5 // pred_check
        %p359 = pneg %p358
      $region34: #{encoder_forward.1} parent=5 // pred_check_branch
        %361 = sbr.rel (%p359) target = $region36
      $region35: #{encoder_forward.1} parent=5 // pred_region
        // Predicated region
        $region37: #{encoder_forward.1} parent=35 // pred_check
          %p362 = pneg %p103
        $region38: #{encoder_forward.1} parent=35 // pred_check_branch
          %364 = sbr.rel (%p362) target = $region40
        $region39: #{encoder_forward.1} parent=35 // pred_region
          %p365 = scmp.lt.s32.totalorder %s20, 1
          %s366 = scalar_select %p365, %s20, 1
          %s367 = smul.addr %s366, 8
          %s368 = scalar_lea.vmem %s3, %s367
        $region40: #{encoder_forward.1} parent=35 // pred_fallthru
          _
        // Predicated region
        $region41: #{encoder_forward.1} parent=35 // pred_check
          %p369 = pneg %p129
        $region42: #{encoder_forward.1} parent=35 // pred_check_branch
          %371 = sbr.rel (%p369) target = $region44
        $region43: #{encoder_forward.1} parent=35 // pred_region
          %p372 = scmp.lt.s32.totalorder %s20, 1
          %s373 = scalar_select %p372, %s20, 1
          %s374 = smul.addr %s373, 48
          %s375 = smul.addr %s374, 8
          %s376 = scalar_lea.vmem %s4, %s375
        $region44: #{encoder_forward.1} parent=35 // pred_fallthru
          _
        // Predicated region
        $region45: #{encoder_forward.1} parent=35 // pred_check
          %p377 = pneg %p155
        $region46: #{encoder_forward.1} parent=35 // pred_check_branch
          %379 = sbr.rel (%p377) target = $region48
        $region47: #{encoder_forward.1} parent=35 // pred_region
          %p380 = scmp.lt.s32.totalorder %s20, 1
          %s381 = scalar_select %p380, %s20, 1
          %s382 = smul.addr %s381, 4
          %s383 = smul.addr %s382, 8
          %s384 = scalar_lea.vmem %s5, %s383
        $region48: #{encoder_forward.1} parent=35 // pred_fallthru
          _
        // Predicated region
        $region49: #{encoder_forward.1} parent=35 // pred_check
          %p385 = pneg %p181
        $region50: #{encoder_forward.1} parent=35 // pred_check_branch
          %387 = sbr.rel (%p385) target = $region52
        $region51: #{encoder_forward.1} parent=35 // pred_region
          %p388 = scmp.lt.s32.totalorder %s20, 1
          %s389 = scalar_select %p388, %s20, 1
          %s390 = smul.addr %s389, 4
          %s391 = smul.addr %s390, 8
          %s392 = scalar_lea.vmem %s6, %s391
        $region52: #{encoder_forward.1} parent=35 // pred_fallthru
          _
        // Predicated region
        $region53: #{encoder_forward.1} parent=35 // pred_check
          %p393 = pneg %p207
        $region54: #{encoder_forward.1} parent=35 // pred_check_branch
          %395 = sbr.rel (%p393) target = $region56
        $region55: #{encoder_forward.1} parent=35 // pred_region
          %p396 = scmp.lt.s32.totalorder %s20, 1
          %s397 = scalar_select %p396, %s20, 1
          %s398 = scalar_lea.vmem %s7, %s397
        $region56: #{encoder_forward.1} parent=35 // pred_fallthru
          _
        // Predicated region
        $region57: #{encoder_forward.1} parent=35 // pred_check
          %p399 = pneg %p233
        $region58: #{encoder_forward.1} parent=35 // pred_check_branch
          %401 = sbr.rel (%p399) target = $region60
        $region59: #{encoder_forward.1} parent=35 // pred_region
          %p402 = scmp.lt.s32.totalorder %s20, 1
          %s403 = scalar_select %p402, %s20, 1
          %s404 = smul.addr %s403, 16
          %s405 = smul.addr %s404, 8
          %s406 = scalar_lea.vmem %s8, %s405
        $region60: #{encoder_forward.1} parent=35 // pred_fallthru
          _
      $region36: #{encoder_forward.1} parent=5 // pred_fallthru
        _
      %p407 = scmp.le.s32.totalorder 1, %s20
      %p408 = scmp.lt.s32.totalorder %s20, 3
      %p409 = pnand %p407, %p408
      %p410 = pneg %p409
      // Predicated region
      $region61: #{encoder_forward.1} parent=5 // pred_check
        _
      $region62: #{encoder_forward.1} parent=5 // pred_check_branch
        %412 = sbr.rel (%p409) target = $region64
      $region63: #{encoder_forward.1} parent=5 // pred_region
        %s413 = ssub.s32 %s20, 1
        %p414 = pneg %p41
        %p415 = pneg %p38
        %p416 = pneg %p62
        %p417 = pneg %p59
        %p418 = pneg %p83
        %p419 = pneg %p80
        %p420 = scmp.lt.s32.totalorder %s25, 1
        %s421 = scalar_select %p420, %s25, 1
        %s422 = smul.addr %s421, 8
        %s423 = scalar_lea.vmem %s3, %s422
        %p424 = pneg %p109
        %p425 = pneg %p106
        %p426 = scmp.lt.s32.totalorder %s25, 1
        %s427 = scalar_select %p426, %s25, 1
        %s428 = smul.addr %s427, 48
        %s429 = smul.addr %s428, 8
        %s430 = scalar_lea.vmem %s4, %s429
        %p431 = pneg %p135
        %p432 = pneg %p132
        %p433 = scmp.lt.s32.totalorder %s25, 1
        %s434 = scalar_select %p433, %s25, 1
        %s435 = smul.addr %s434, 4
        %s436 = smul.addr %s435, 8
        %s437 = scalar_lea.vmem %s5, %s436
        %p438 = pneg %p161
        %p439 = pneg %p158
        %p440 = scmp.lt.s32.totalorder %s25, 1
        %s441 = scalar_select %p440, %s25, 1
        %s442 = smul.addr %s441, 4
        %s443 = smul.addr %s442, 8
        %s444 = scalar_lea.vmem %s6, %s443
        %p445 = pneg %p187
        %p446 = pneg %p184
        %p447 = scmp.lt.s32.totalorder %s25, 1
        %s448 = scalar_select %p447, %s25, 1
        %s449 = scalar_lea.vmem %s7, %s448
        %p450 = pneg %p213
        %p451 = pneg %p210
        %p452 = scmp.lt.s32.totalorder %s25, 1
        %s453 = scalar_select %p452, %s25, 1
        %s454 = smul.addr %s453, 16
        %s455 = smul.addr %s454, 8
        %s456 = scalar_lea.vmem %s8, %s455
        %p457 = pneg %p239
        %p458 = pneg %p236
        %p459 = pneg %p260
        %p460 = pneg %p257
        %p461 = pneg %p281
        %p462 = pneg %p278
        %p463 = pneg %p302
        %p464 = pneg %p299
        %p465 = pneg %p328
        %p466 = pneg %p325
        %p467 = scmp.lt.s32.totalorder %s25, 1
        %s468 = scalar_select %p467, %s25, 1
        %s469 = smul.addr %s468, 2
        %s470 = smul.addr %s469, 8
        %s471 = scalar_lea.vmem %s12, %s470
        %p472 = scmp.lt.s32.totalorder %s25, 1
        %s473 = scalar_select %p472, %s25, 1
        %s474 = smul.addr %s473, 8
        %s475 = scalar_lea.vmem %s3, %s474
        %p476 = scmp.lt.s32.totalorder %s25, 1
        %s477 = scalar_select %p476, %s25, 1
        %s478 = smul.addr %s477, 48
        %s479 = smul.addr %s478, 8
        %s480 = scalar_lea.vmem %s4, %s479
        %p481 = scmp.lt.s32.totalorder %s25, 1
        %s482 = scalar_select %p481, %s25, 1
        %s483 = smul.addr %s482, 4
        %s484 = smul.addr %s483, 8
        %s485 = scalar_lea.vmem %s5, %s484
        %p486 = scmp.lt.s32.totalorder %s25, 1
        %s487 = scalar_select %p486, %s25, 1
        %s488 = smul.addr %s487, 4
        %s489 = smul.addr %s488, 8
        %s490 = scalar_lea.vmem %s6, %s489
        %p491 = scmp.lt.s32.totalorder %s25, 1
        %s492 = scalar_select %p491, %s25, 1
        %s493 = scalar_lea.vmem %s7, %s492
        %p494 = scmp.lt.s32.totalorder %s25, 1
        %s495 = scalar_select %p494, %s25, 1
        %s496 = smul.addr %s495, 16
        %s497 = smul.addr %s496, 8
        %s498 = scalar_lea.vmem %s8, %s497
        %p499 = scmp.lt.s32.totalorder %s25, 1
        %s500 = scalar_select %p499, %s25, 1
        %s501 = smul.addr %s500, 2
        %s502 = smul.addr %s501, 8
        %s503 = scalar_lea.vmem %s12, %s502
        %p504 = scmp.eq.s32.totalorder %s25, 0
        // Predicated region
        $region65: #{encoder_forward.1} parent=63 // pred_check
          %p505 = pneg %p504
        $region66: #{encoder_forward.1} parent=63 // pred_check_branch
          %507 = sbr.rel (%p505) target = $region68
        $region67: #{encoder_forward.1} parent=63 // pred_region
          %v508 = vld [vmem:[%s0] sm:$0xff]
          %v509 = vld [vmem:[%s0 + $0x8] sm:$0xff]
          %v510 = vlaneseq
          %v511 = vand.u32 %v510, 127
          %512 = vset.pattern.permute.xlu0 0
          %513 = vperm.xlu0 %512, %v508
          %v514 = vpop.permute.xlu0 %513
          %515 = vset.pattern.permute.xlu0 0
          %516 = vperm.xlu0 %515, %v509
          %v517 = vpop.permute.xlu0 %516
          %vm518 = vcmp.eq.s32.totalorder %v514, %v511
          %vm519 = vcmp.eq.s32.totalorder %v517, %v511
          %v520 = vsel %vm518, 1, 0
          %v521 = vsel %vm519, 1, 0
          %v522 = vcvt.s32.f32 %v520
          %v523 = vcvt.s32.f32 %v521
          %v524 = vld [vmem:[%s1] sm:$0xff]
          %v525 = vld [vmem:[%s1 + $0x8] sm:$0xff]
          %v526 = vld [vmem:[%s1 + $0x10] sm:$0xff]
          %v527 = vld [vmem:[%s1 + $0x18] sm:$0xff]
          %v528 = vld [vmem:[%s2] sm:$0xff]
          %vm529 = vcmask 261120
          %v531 = vsel %vm529, %v522, 0
          %v534 = vsel %vm529, %v523, 0
          %536 = vmatpush.msra.mxu0 0.0
          %537 = vmatpush.msra.mxu0 0.0
          %538 = vmatpush.msra.mxu0 0.0
          %539 = vmatpush.msra.mxu0 0.0
          %540 = vmatpush.msra.mxu0 0.0
          %541 = vmatpush.msra.mxu0 0.0
          %542 = vmatpush.msra.mxu0 0.0
          %543 = vmatpush.msra.mxu0 0.0
          %544 = vmatpush.msra.mxu0 0.0
          %545 = vmatpush.msra.mxu0 0.0
          %546 = vmatpush.msra.mxu0 0.0
          %547 = vmatpush.msra.mxu0 0.0
          %548 = vmatpush.msra.mxu0 %v527
          %549 = vmatpush.msra.mxu0 %v526
          %550 = vmatpush.msra.mxu0 %v525
          %551 = vmatpush.msra.mxu0 %v524
          %552 = vmatmul.f32.gmra.mxu0 %v531
          %v553 = vpop.f32.mrf.mxu0
          %v554 = vadd.f32 %v528, %v553
          %555 = vmatmul.f32.gmra.mxu0 %v534
          %v556 = vpop.f32.mrf.mxu0
          %v557 = vadd.f32 %v528, %v556
          %558 = vdwg.mxu0
          %559 = vst.msk [vmem:[#allocation2] sm:$0xff] %vm529, %v554
          %560 = vst.msk [vmem:[#allocation2 + $0x8] sm:$0xff] %vm529, %v557
        $region68: #{encoder_forward.1} parent=63 // pred_fallthru
          _
        %v561 = vld [vmem:[#allocation2] sm:$0xff]
        %v562 = vld [vmem:[#allocation2 + $0x8] sm:$0xff]
        %v563 = vld [vmem:[%s475] sm:$0x3f]
        %vm564 = vcmask 261120
        %v565 = vsel %vm564, %v561, 0.0
        %566 = vadd.xlane.f32.xlu0 %v565
        %v567 = vpop.xlane.xlu0 %566
        %v568 = vsel %vm564, %v562, 0.0
        %569 = vadd.xlane.f32.xlu0 %v568
        %v570 = vpop.xlane.xlu0 %569
        %v571 = vrcp.pop 32.0
        %v572 = vmul.f32 32.0, %v571
        %v573 = vsub.f32 1.0, %v572
        %v574 = vmul.f32 %v571, %v573
        %v575 = vadd.f32 %v571, %v574
        %vm576 = vweird.f32 %v571
        %v577 = vsel %vm576, %v571, %v575
        %v578 = vmul.f32 %v567, %v577
        %v579 = vmul.f32 %v570, %v577
        %v580 = vsub.f32 %v561, %v578
        %v581 = vsub.f32 %v562, %v579
        %v582 = vmul.f32 %v580, %v580
        %v583 = vmul.f32 %v581, %v581
        %v584 = vsel %vm564, %v582, 0.0
        %585 = vadd.xlane.f32.xlu0 %v584
        %v586 = vpop.xlane.xlu0 %585
        %v587 = vsel %vm564, %v583, 0.0
        %588 = vadd.xlane.f32.xlu0 %v587
        %v589 = vpop.xlane.xlu0 %588
        %v590 = vmul.f32 %v586, %v577
        %v591 = vmul.f32 %v589, %v577
        %v592 = vadd.f32 %v590, 1e-05
        %v593 = vadd.f32 %v591, 1e-05
        %v594 = vrsqrt.pop %v592
        %v595 = vmul.f32 %v594, %v592
        %v596 = vmul.f32 %v595, %v594
        %v597 = vmul.f32 0.5, %v596
        %v598 = vsub.f32 1.5, %v597
        %v599 = vmul.f32 %v594, %v598
        %vm600 = vweird.f32 %v592
        %vm601 = vweird.f32 %v594
        %vm602 = vmor %vm600, %vm601
        %v603 = vsel %vm602, %v594, %v599
        %v604 = vrsqrt.pop %v593
        %v605 = vmul.f32 %v604, %v593
        %v606 = vmul.f32 %v605, %v604
        %v607 = vmul.f32 0.5, %v606
        %v608 = vsub.f32 1.5, %v607
        %v609 = vmul.f32 %v604, %v608
        %vm610 = vweird.f32 %v593
        %vm611 = vweird.f32 %v604
        %vm612 = vmor %vm610, %vm611
        %v613 = vsel %vm612, %v604, %v609
        %v614 = vmul.f32 %v580, %v603
        %v615 = vmul.f32 %v581, %v613
        %v616 = vperm.slane %v563, 0
        %v617 = vmul.f32 %v614, %v616
        %v618 = vmul.f32 %v615, %v616
        %v619 = vperm.slane %v563, 1
        %v620 = vadd.f32 %v617, %v619
        %v621 = vadd.f32 %v618, %v619
        %v622 = vld [vmem:[%s480] sm:$0xff]
        %v623 = vld [vmem:[%s480 + $0x8] sm:$0xff]
        %v624 = vld [vmem:[%s480 + $0x10] sm:$0xff]
        %v625 = vld [vmem:[%s480 + $0x18] sm:$0xff]
        %v626 = vld [vmem:[%s480 + $0x20] sm:$0xff]
        %v627 = vld [vmem:[%s480 + $0x28] sm:$0xff]
        %v628 = vld [vmem:[%s480 + $0x30] sm:$0xff]
        %v629 = vld [vmem:[%s480 + $0x38] sm:$0xff]
        %v630 = vld [vmem:[%s480 + $0x40] sm:$0xff]
        %v631 = vld [vmem:[%s480 + $0x48] sm:$0xff]
        %v632 = vld [vmem:[%s480 + $0x50] sm:$0xff]
        %v633 = vld [vmem:[%s480 + $0x58] sm:$0xff]
        %v634 = vld [vmem:[%s480 + $0x60] sm:$0xff]
        %v635 = vld [vmem:[%s480 + $0x68] sm:$0xff]
        %v636 = vld [vmem:[%s480 + $0x70] sm:$0xff]
        %v637 = vld [vmem:[%s480 + $0x78] sm:$0xff]
        %v638 = vld [vmem:[%s480 + $0x80] sm:$0xff]
        %v639 = vld [vmem:[%s480 + $0x88] sm:$0xff]
        %v640 = vld [vmem:[%s480 + $0x90] sm:$0xff]
        %v641 = vld [vmem:[%s480 + $0x98] sm:$0xff]
        %v642 = vld [vmem:[%s480 + $0xa0] sm:$0xff]
        %v643 = vld [vmem:[%s480 + $0xa8] sm:$0xff]
        %v644 = vld [vmem:[%s480 + $0xb0] sm:$0xff]
        %v645 = vld [vmem:[%s480 + $0xb8] sm:$0xff]
        %v646 = vld [vmem:[%s480 + $0xc0] sm:$0xff]
        %v647 = vld [vmem:[%s480 + $0xc8] sm:$0xff]
        %v648 = vld [vmem:[%s480 + $0xd0] sm:$0xff]
        %v649 = vld [vmem:[%s480 + $0xd8] sm:$0xff]
        %v650 = vld [vmem:[%s480 + $0xe0] sm:$0xff]
        %v651 = vld [vmem:[%s480 + $0xe8] sm:$0xff]
        %v652 = vld [vmem:[%s480 + $0xf0] sm:$0xff]
        %v653 = vld [vmem:[%s480 + $0xf8] sm:$0xff]
        %v654 = vld [vmem:[%s480 + $0x100] sm:$0xff]
        %v655 = vld [vmem:[%s480 + $0x108] sm:$0xff]
        %v656 = vld [vmem:[%s480 + $0x110] sm:$0xff]
        %v657 = vld [vmem:[%s480 + $0x118] sm:$0xff]
        %v658 = vld [vmem:[%s480 + $0x120] sm:$0xff]
        %v659 = vld [vmem:[%s480 + $0x128] sm:$0xff]
        %v660 = vld [vmem:[%s480 + $0x130] sm:$0xff]
        %v661 = vld [vmem:[%s480 + $0x138] sm:$0xff]
        %v662 = vld [vmem:[%s480 + $0x140] sm:$0xff]
        %v663 = vld [vmem:[%s480 + $0x148] sm:$0xff]
        %v664 = vld [vmem:[%s480 + $0x150] sm:$0xff]
        %v665 = vld [vmem:[%s480 + $0x158] sm:$0xff]
        %v666 = vld [vmem:[%s480 + $0x160] sm:$0xff]
        %v667 = vld [vmem:[%s480 + $0x168] sm:$0xff]
        %v668 = vld [vmem:[%s480 + $0x170] sm:$0xff]
        %v669 = vld [vmem:[%s480 + $0x178] sm:$0xff]
        %v671 = vsel %vm564, %v620, 0
        %v674 = vsel %vm564, %v621, 0
        %676 = vmatpush.msra.mxu0 0.0
        %677 = vmatpush.msra.mxu0 0.0
        %678 = vmatpush.msra.mxu0 0.0
        %679 = vmatpush.msra.mxu0 0.0
        %680 = vmatpush.msra.mxu0 0.0
        %681 = vmatpush.msra.mxu0 0.0
        %682 = vmatpush.msra.mxu0 0.0
        %683 = vmatpush.msra.mxu0 0.0
        %684 = vmatpush.msra.mxu0 0.0
        %685 = vmatpush.msra.mxu0 0.0
        %686 = vmatpush.msra.mxu0 0.0
        %687 = vmatpush.msra.mxu0 0.0
        %688 = vmatpush.msra.mxu0 %v625
        %689 = vmatpush.msra.mxu0 %v624
        %690 = vmatpush.msra.mxu0 %v623
        %691 = vmatpush.msra.mxu0 %v622
        %692 = vmatmul.f32.gmra.mxu0 %v671
        %v693 = vpop.f32.mrf.mxu0
        %v694 = vadd.f32 0.0, %v693
        %695 = vmatmul.f32.gmra.mxu0 %v674
        %v696 = vpop.f32.mrf.mxu0
        %v697 = vadd.f32 0.0, %v696
        %698 = vdwg.mxu0
        %699 = vmatpush.msra.mxu0 0.0
        %700 = vmatpush.msra.mxu0 0.0
        %701 = vmatpush.msra.mxu0 0.0
        %702 = vmatpush.msra.mxu0 0.0
        %703 = vmatpush.msra.mxu0 0.0
        %704 = vmatpush.msra.mxu0 0.0
        %705 = vmatpush.msra.mxu0 0.0
        %706 = vmatpush.msra.mxu0 0.0
        %707 = vmatpush.msra.mxu0 0.0
        %708 = vmatpush.msra.mxu0 0.0
        %709 = vmatpush.msra.mxu0 0.0
        %710 = vmatpush.msra.mxu0 0.0
        %711 = vmatpush.msra.mxu0 %v629
        %712 = vmatpush.msra.mxu0 %v628
        %713 = vmatpush.msra.mxu0 %v627
        %714 = vmatpush.msra.mxu0 %v626
        %715 = vmatmul.f32.gmra.mxu0 %v671
        %v716 = vpop.f32.mrf.mxu0
        %v717 = vadd.f32 0.0, %v716
        %718 = vmatmul.f32.gmra.mxu0 %v674
        %v719 = vpop.f32.mrf.mxu0
        %v720 = vadd.f32 0.0, %v719
        %721 = vdwg.mxu0
        %722 = vmatpush.msra.mxu0 0.0
        %723 = vmatpush.msra.mxu0 0.0
        %724 = vmatpush.msra.mxu0 0.0
        %725 = vmatpush.msra.mxu0 0.0
        %726 = vmatpush.msra.mxu0 0.0
        %727 = vmatpush.msra.mxu0 0.0
        %728 = vmatpush.msra.mxu0 0.0
        %729 = vmatpush.msra.mxu0 0.0
        %730 = vmatpush.msra.mxu0 0.0
        %731 = vmatpush.msra.mxu0 0.0
        %732 = vmatpush.msra.mxu0 0.0
        %733 = vmatpush.msra.mxu0 0.0
        %734 = vmatpush.msra.mxu0 %v633
        %735 = vmatpush.msra.mxu0 %v632
        %736 = vmatpush.msra.mxu0 %v631
        %737 = vmatpush.msra.mxu0 %v630
        %738 = vmatmul.f32.gmra.mxu0 %v671
        %v739 = vpop.f32.mrf.mxu0
        %v740 = vadd.f32 0.0, %v739
        %741 = vmatmul.f32.gmra.mxu0 %v674
        %v742 = vpop.f32.mrf.mxu0
        %v743 = vadd.f32 0.0, %v742
        %744 = vdwg.mxu0
        %745 = vmatpush.msra.mxu0 0.0
        %746 = vmatpush.msra.mxu0 0.0
        %747 = vmatpush.msra.mxu0 0.0
        %748 = vmatpush.msra.mxu0 0.0
        %749 = vmatpush.msra.mxu0 0.0
        %750 = vmatpush.msra.mxu0 0.0
        %751 = vmatpush.msra.mxu0 0.0
        %752 = vmatpush.msra.mxu0 0.0
        %753 = vmatpush.msra.mxu0 0.0
        %754 = vmatpush.msra.mxu0 0.0
        %755 = vmatpush.msra.mxu0 0.0
        %756 = vmatpush.msra.mxu0 0.0
        %757 = vmatpush.msra.mxu0 %v637
        %758 = vmatpush.msra.mxu0 %v636
        %759 = vmatpush.msra.mxu0 %v635
        %760 = vmatpush.msra.mxu0 %v634
        %761 = vmatmul.f32.gmra.mxu0 %v671
        %v762 = vpop.f32.mrf.mxu0
        %v763 = vadd.f32 0.0, %v762
        %764 = vmatmul.f32.gmra.mxu0 %v674
        %v765 = vpop.f32.mrf.mxu0
        %v766 = vadd.f32 0.0, %v765
        %767 = vdwg.mxu0
        %768 = vmatpush.msra.mxu0 0.0
        %769 = vmatpush.msra.mxu0 0.0
        %770 = vmatpush.msra.mxu0 0.0
        %771 = vmatpush.msra.mxu0 0.0
        %772 = vmatpush.msra.mxu0 0.0
        %773 = vmatpush.msra.mxu0 0.0
        %774 = vmatpush.msra.mxu0 0.0
        %775 = vmatpush.msra.mxu0 0.0
        %776 = vmatpush.msra.mxu0 0.0
        %777 = vmatpush.msra.mxu0 0.0
        %778 = vmatpush.msra.mxu0 0.0
        %779 = vmatpush.msra.mxu0 0.0
        %780 = vmatpush.msra.mxu0 %v641
        %781 = vmatpush.msra.mxu0 %v640
        %782 = vmatpush.msra.mxu0 %v639
        %783 = vmatpush.msra.mxu0 %v638
        %784 = vmatmul.f32.gmra.mxu0 %v671
        %v785 = vpop.f32.mrf.mxu0
        %v786 = vadd.f32 0.0, %v785
        %787 = vmatmul.f32.gmra.mxu0 %v674
        %v788 = vpop.f32.mrf.mxu0
        %v789 = vadd.f32 0.0, %v788
        %790 = vdwg.mxu0
        %791 = vmatpush.msra.mxu0 0.0
        %792 = vmatpush.msra.mxu0 0.0
        %793 = vmatpush.msra.mxu0 0.0
        %794 = vmatpush.msra.mxu0 0.0
        %795 = vmatpush.msra.mxu0 0.0
        %796 = vmatpush.msra.mxu0 0.0
        %797 = vmatpush.msra.mxu0 0.0
        %798 = vmatpush.msra.mxu0 0.0
        %799 = vmatpush.msra.mxu0 0.0
        %800 = vmatpush.msra.mxu0 0.0
        %801 = vmatpush.msra.mxu0 0.0
        %802 = vmatpush.msra.mxu0 0.0
        %803 = vmatpush.msra.mxu0 %v645
        %804 = vmatpush.msra.mxu0 %v644
        %805 = vmatpush.msra.mxu0 %v643
        %806 = vmatpush.msra.mxu0 %v642
        %807 = vmatmul.f32.gmra.mxu0 %v671
        %v808 = vpop.f32.mrf.mxu0
        %v809 = vadd.f32 0.0, %v808
        %810 = vmatmul.f32.gmra.mxu0 %v674
        %v811 = vpop.f32.mrf.mxu0
        %v812 = vadd.f32 0.0, %v811
        %813 = vdwg.mxu0
        %814 = vmatpush.msra.mxu0 0.0
        %815 = vmatpush.msra.mxu0 0.0
        %816 = vmatpush.msra.mxu0 0.0
        %817 = vmatpush.msra.mxu0 0.0
        %818 = vmatpush.msra.mxu0 0.0
        %819 = vmatpush.msra.mxu0 0.0
        %820 = vmatpush.msra.mxu0 0.0
        %821 = vmatpush.msra.mxu0 0.0
        %822 = vmatpush.msra.mxu0 0.0
        %823 = vmatpush.msra.mxu0 0.0
        %824 = vmatpush.msra.mxu0 0.0
        %825 = vmatpush.msra.mxu0 0.0
        %826 = vmatpush.msra.mxu0 %v649
        %827 = vmatpush.msra.mxu0 %v648
        %828 = vmatpush.msra.mxu0 %v647
        %829 = vmatpush.msra.mxu0 %v646
        %830 = vmatmul.f32.gmra.mxu0 %v671
        %v831 = vpop.f32.mrf.mxu0
        %v832 = vadd.f32 0.0, %v831
        %833 = vmatmul.f32.gmra.mxu0 %v674
        %v834 = vpop.f32.mrf.mxu0
        %v835 = vadd.f32 0.0, %v834
        %836 = vdwg.mxu0
        %837 = vmatpush.msra.mxu0 0.0
        %838 = vmatpush.msra.mxu0 0.0
        %839 = vmatpush.msra.mxu0 0.0
        %840 = vmatpush.msra.mxu0 0.0
        %841 = vmatpush.msra.mxu0 0.0
        %842 = vmatpush.msra.mxu0 0.0
        %843 = vmatpush.msra.mxu0 0.0
        %844 = vmatpush.msra.mxu0 0.0
        %845 = vmatpush.msra.mxu0 0.0
        %846 = vmatpush.msra.mxu0 0.0
        %847 = vmatpush.msra.mxu0 0.0
        %848 = vmatpush.msra.mxu0 0.0
        %849 = vmatpush.msra.mxu0 %v653
        %850 = vmatpush.msra.mxu0 %v652
        %851 = vmatpush.msra.mxu0 %v651
        %852 = vmatpush.msra.mxu0 %v650
        %853 = vmatmul.f32.gmra.mxu0 %v671
        %v854 = vpop.f32.mrf.mxu0
        %v855 = vadd.f32 0.0, %v854
        %856 = vmatmul.f32.gmra.mxu0 %v674
        %v857 = vpop.f32.mrf.mxu0
        %v858 = vadd.f32 0.0, %v857
        %859 = vdwg.mxu0
        %860 = vmatpush.msra.mxu0 0.0
        %861 = vmatpush.msra.mxu0 0.0
        %862 = vmatpush.msra.mxu0 0.0
        %863 = vmatpush.msra.mxu0 0.0
        %864 = vmatpush.msra.mxu0 0.0
        %865 = vmatpush.msra.mxu0 0.0
        %866 = vmatpush.msra.mxu0 0.0
        %867 = vmatpush.msra.mxu0 0.0
        %868 = vmatpush.msra.mxu0 0.0
        %869 = vmatpush.msra.mxu0 0.0
        %870 = vmatpush.msra.mxu0 0.0
        %871 = vmatpush.msra.mxu0 0.0
        %872 = vmatpush.msra.mxu0 %v657
        %873 = vmatpush.msra.mxu0 %v656
        %874 = vmatpush.msra.mxu0 %v655
        %875 = vmatpush.msra.mxu0 %v654
        %876 = vmatmul.f32.gmra.mxu0 %v671
        %v877 = vpop.f32.mrf.mxu0
        %v878 = vadd.f32 0.0, %v877
        %879 = vmatmul.f32.gmra.mxu0 %v674
        %v880 = vpop.f32.mrf.mxu0
        %v881 = vadd.f32 0.0, %v880
        %882 = vdwg.mxu0
        %883 = vmatpush.msra.mxu0 0.0
        %884 = vmatpush.msra.mxu0 0.0
        %885 = vmatpush.msra.mxu0 0.0
        %886 = vmatpush.msra.mxu0 0.0
        %887 = vmatpush.msra.mxu0 0.0
        %888 = vmatpush.msra.mxu0 0.0
        %889 = vmatpush.msra.mxu0 0.0
        %890 = vmatpush.msra.mxu0 0.0
        %891 = vmatpush.msra.mxu0 0.0
        %892 = vmatpush.msra.mxu0 0.0
        %893 = vmatpush.msra.mxu0 0.0
        %894 = vmatpush.msra.mxu0 0.0
        %895 = vmatpush.msra.mxu0 %v661
        %896 = vmatpush.msra.mxu0 %v660
        %897 = vmatpush.msra.mxu0 %v659
        %898 = vmatpush.msra.mxu0 %v658
        %899 = vmatmul.f32.gmra.mxu0 %v671
        %v900 = vpop.f32.mrf.mxu0
        %v901 = vadd.f32 0.0, %v900
        %902 = vmatmul.f32.gmra.mxu0 %v674
        %v903 = vpop.f32.mrf.mxu0
        %v904 = vadd.f32 0.0, %v903
        %905 = vdwg.mxu0
        %906 = vmatpush.msra.mxu0 0.0
        %907 = vmatpush.msra.mxu0 0.0
        %908 = vmatpush.msra.mxu0 0.0
        %909 = vmatpush.msra.mxu0 0.0
        %910 = vmatpush.msra.mxu0 0.0
        %911 = vmatpush.msra.mxu0 0.0
        %912 = vmatpush.msra.mxu0 0.0
        %913 = vmatpush.msra.mxu0 0.0
        %914 = vmatpush.msra.mxu0 0.0
        %915 = vmatpush.msra.mxu0 0.0
        %916 = vmatpush.msra.mxu0 0.0
        %917 = vmatpush.msra.mxu0 0.0
        %918 = vmatpush.msra.mxu0 %v665
        %919 = vmatpush.msra.mxu0 %v664
        %920 = vmatpush.msra.mxu0 %v663
        %921 = vmatpush.msra.mxu0 %v662
        %922 = vmatmul.f32.gmra.mxu0 %v671
        %v923 = vpop.f32.mrf.mxu0
        %v924 = vadd.f32 0.0, %v923
        %925 = vmatmul.f32.gmra.mxu0 %v674
        %v926 = vpop.f32.mrf.mxu0
        %v927 = vadd.f32 0.0, %v926
        %928 = vdwg.mxu0
        %929 = vmatpush.msra.mxu0 0.0
        %930 = vmatpush.msra.mxu0 0.0
        %931 = vmatpush.msra.mxu0 0.0
        %932 = vmatpush.msra.mxu0 0.0
        %933 = vmatpush.msra.mxu0 0.0
        %934 = vmatpush.msra.mxu0 0.0
        %935 = vmatpush.msra.mxu0 0.0
        %936 = vmatpush.msra.mxu0 0.0
        %937 = vmatpush.msra.mxu0 0.0
        %938 = vmatpush.msra.mxu0 0.0
        %939 = vmatpush.msra.mxu0 0.0
        %940 = vmatpush.msra.mxu0 0.0
        %941 = vmatpush.msra.mxu0 %v669
        %942 = vmatpush.msra.mxu0 %v668
        %943 = vmatpush.msra.mxu0 %v667
        %944 = vmatpush.msra.mxu0 %v666
        %945 = vmatmul.f32.gmra.mxu0 %v671
        %v946 = vpop.f32.mrf.mxu0
        %v947 = vadd.f32 0.0, %v946
        %948 = vmatmul.f32.gmra.mxu0 %v674
        %v949 = vpop.f32.mrf.mxu0
        %v950 = vadd.f32 0.0, %v949
        %951 = vdwg.mxu0
        %vm952 = vcmask 64512
        %v954 = vsel %vm952, %v694, 0
        %v957 = vsel %vm952, %v786, 0
        %959 = vmatpush.xpose.msra.mxu0 0.0
        %960 = vmatpush.xpose.msra.mxu0 0.0
        %961 = vmatpush.xpose.msra.mxu0 0.0
        %962 = vmatpush.xpose.msra.mxu0 0.0
        %963 = vmatpush.xpose.msra.mxu0 0.0
        %964 = vmatpush.xpose.msra.mxu0 0.0
        %965 = vmatpush.xpose.msra.mxu0 0.0
        %966 = vmatpush.xpose.msra.mxu0 0.0
        %967 = vmatpush.xpose.msra.mxu0 0.0
        %968 = vmatpush.xpose.msra.mxu0 0.0
        %969 = vmatpush.xpose.msra.mxu0 0.0
        %970 = vmatpush.xpose.msra.mxu0 0.0
        %971 = vmatpush.xpose.msra.mxu0 0.0
        %972 = vmatpush.xpose.msra.mxu0 0.0
        %973 = vmatpush.xpose.msra.mxu0 0.0
        %974 = vmatpush.xpose.msra.mxu0 %v957
        %975 = vmatmul.f32.gmra.mxu0 %v954
        %v976 = vpop.f32.mrf.mxu0
        %v977 = vadd.f32 0.0, %v976
        %978 = vdwg.mxu0
        %v980 = vsel %vm952, %v717, 0
        %v983 = vsel %vm952, %v809, 0
        %985 = vmatpush.xpose.msra.mxu0 0.0
        %986 = vmatpush.xpose.msra.mxu0 0.0
        %987 = vmatpush.xpose.msra.mxu0 0.0
        %988 = vmatpush.xpose.msra.mxu0 0.0
        %989 = vmatpush.xpose.msra.mxu0 0.0
        %990 = vmatpush.xpose.msra.mxu0 0.0
        %991 = vmatpush.xpose.msra.mxu0 0.0
        %992 = vmatpush.xpose.msra.mxu0 0.0
        %993 = vmatpush.xpose.msra.mxu0 0.0
        %994 = vmatpush.xpose.msra.mxu0 0.0
        %995 = vmatpush.xpose.msra.mxu0 0.0
        %996 = vmatpush.xpose.msra.mxu0 0.0
        %997 = vmatpush.xpose.msra.mxu0 0.0
        %998 = vmatpush.xpose.msra.mxu0 0.0
        %999 = vmatpush.xpose.msra.mxu0 0.0
        %1000 = vmatpush.xpose.msra.mxu0 %v983
        %1001 = vmatmul.f32.gmra.mxu0 %v980
        %v1002 = vpop.f32.mrf.mxu0
        %v1003 = vadd.f32 0.0, %v1002
        %1004 = vdwg.mxu0
        %v1006 = vsel %vm952, %v740, 0
        %v1009 = vsel %vm952, %v832, 0
        %1011 = vmatpush.xpose.msra.mxu0 0.0
        %1012 = vmatpush.xpose.msra.mxu0 0.0
        %1013 = vmatpush.xpose.msra.mxu0 0.0
        %1014 = vmatpush.xpose.msra.mxu0 0.0
        %1015 = vmatpush.xpose.msra.mxu0 0.0
        %1016 = vmatpush.xpose.msra.mxu0 0.0
        %1017 = vmatpush.xpose.msra.mxu0 0.0
        %1018 = vmatpush.xpose.msra.mxu0 0.0
        %1019 = vmatpush.xpose.msra.mxu0 0.0
        %1020 = vmatpush.xpose.msra.mxu0 0.0
        %1021 = vmatpush.xpose.msra.mxu0 0.0
        %1022 = vmatpush.xpose.msra.mxu0 0.0
        %1023 = vmatpush.xpose.msra.mxu0 0.0
        %1024 = vmatpush.xpose.msra.mxu0 0.0
        %1025 = vmatpush.xpose.msra.mxu0 0.0
        %1026 = vmatpush.xpose.msra.mxu0 %v1009
        %1027 = vmatmul.f32.gmra.mxu0 %v1006
        %v1028 = vpop.f32.mrf.mxu0
        %v1029 = vadd.f32 0.0, %v1028
        %1030 = vdwg.mxu0
        %v1032 = vsel %vm952, %v763, 0
        %v1035 = vsel %vm952, %v855, 0
        %1037 = vmatpush.xpose.msra.mxu0 0.0
        %1038 = vmatpush.xpose.msra.mxu0 0.0
        %1039 = vmatpush.xpose.msra.mxu0 0.0
        %1040 = vmatpush.xpose.msra.mxu0 0.0
        %1041 = vmatpush.xpose.msra.mxu0 0.0
        %1042 = vmatpush.xpose.msra.mxu0 0.0
        %1043 = vmatpush.xpose.msra.mxu0 0.0
        %1044 = vmatpush.xpose.msra.mxu0 0.0
        %1045 = vmatpush.xpose.msra.mxu0 0.0
        %1046 = vmatpush.xpose.msra.mxu0 0.0
        %1047 = vmatpush.xpose.msra.mxu0 0.0
        %1048 = vmatpush.xpose.msra.mxu0 0.0
        %1049 = vmatpush.xpose.msra.mxu0 0.0
        %1050 = vmatpush.xpose.msra.mxu0 0.0
        %1051 = vmatpush.xpose.msra.mxu0 0.0
        %1052 = vmatpush.xpose.msra.mxu0 %v1035
        %1053 = vmatmul.f32.gmra.mxu0 %v1032
        %v1054 = vpop.f32.mrf.mxu0
        %v1055 = vadd.f32 0.0, %v1054
        %1056 = vdwg.mxu0
        %v1057 = vmul.f32 %v977, 0.35355338
        %v1058 = vmul.f32 %v1003, 0.35355338
        %v1059 = vmul.f32 %v1029, 0.35355338
        %v1060 = vmul.f32 %v1055, 0.35355338
        %v1061 = vsel %vm952, %v1057, -inf
        %1062 = vmax.xlane.f32.xlu0 %v1061
        %v1063 = vpop.xlane.xlu0 %1062
        %v1064 = vsel %vm952, %v1058, -inf
        %1065 = vmax.xlane.f32.xlu0 %v1064
        %v1066 = vpop.xlane.xlu0 %1065
        %v1067 = vsel %vm952, %v1059, -inf
        %1068 = vmax.xlane.f32.xlu0 %v1067
        %v1069 = vpop.xlane.xlu0 %1068
        %v1070 = vsel %vm952, %v1060, -inf
        %1071 = vmax.xlane.f32.xlu0 %v1070
        %v1072 = vpop.xlane.xlu0 %1071
        %v1073 = vsub.f32 %v1057, %v1063
        %v1074 = vsub.f32 %v1058, %v1066
        %v1075 = vsub.f32 %v1059, %v1069
        %v1076 = vsub.f32 %v1060, %v1072
        %v1077 = vmul.f32 %v1073, 1.442695
        %v1078 = vpow.pop %v1077
        %v1079 = vmul.f32 %v1074, 1.442695
        %v1080 = vpow.pop %v1079
        %v1081 = vmul.f32 %v1075, 1.442695
        %v1082 = vpow.pop %v1081
        %v1083 = vmul.f32 %v1076, 1.442695
        %v1084 = vpow.pop %v1083
        %v1085 = vsel %vm952, %v1078, 0.0
        %1086 = vadd.xlane.f32.xlu0 %v1085
        %v1087 = vpop.xlane.xlu0 %1086
        %v1088 = vsel %vm952, %v1080, 0.0
        %1089 = vadd.xlane.f32.xlu0 %v1088
        %v1090 = vpop.xlane.xlu0 %1089
        %v1091 = vsel %vm952, %v1082, 0.0
        %1092 = vadd.xlane.f32.xlu0 %v1091
        %v1093 = vpop.xlane.xlu0 %1092
        %v1094 = vsel %vm952, %v1084, 0.0
        %1095 = vadd.xlane.f32.xlu0 %v1094
        %v1096 = vpop.xlane.xlu0 %1095
        %v1097 = vrcp.pop %v1087
        %v1098 = vrcp.pop %v1090
        %v1099 = vrcp.pop %v1093
        %v1100 = vrcp.pop %v1096
        %v1101 = vmul.f32 %v1078, %v1097
        %v1102 = vmul.f32 %v1080, %v1098
        %v1103 = vmul.f32 %v1082, %v1099
        %v1104 = vmul.f32 %v1084, %v1100
        %1106 = vrot.lane.b32.xlu0 %v1102, 8
        %v1107 = vpop.permute.xlu0 %1106
        %1110 = vrot.lane.b32.xlu0 %v1103, 16
        %v1111 = vpop.permute.xlu0 %1110
        %1114 = vrot.lane.b32.xlu0 %v1104, 24
        %v1115 = vpop.permute.xlu0 %1114
        %v1117 = vsel %vm952, %v1101, %v1107
        %vm1118 = vcmask 130048
        %v1119 = vsel %vm1118, %v1117, %v1111
        %vm1120 = vcmask 195584
        %v1121 = vsel %vm1120, %v1119, %v1115
        %v1123 = vsel %vm952, %v1101, 0
        %1125 = vmatpush.msra.mxu0 0.0
        %1126 = vmatpush.msra.mxu0 0.0
        %1127 = vmatpush.msra.mxu0 0.0
        %1128 = vmatpush.msra.mxu0 0.0
        %1129 = vmatpush.msra.mxu0 0.0
        %1130 = vmatpush.msra.mxu0 0.0
        %1131 = vmatpush.msra.mxu0 0.0
        %1132 = vmatpush.msra.mxu0 0.0
        %1133 = vmatpush.msra.mxu0 0.0
        %1134 = vmatpush.msra.mxu0 0.0
        %1135 = vmatpush.msra.mxu0 0.0
        %1136 = vmatpush.msra.mxu0 0.0
        %1137 = vmatpush.msra.mxu0 0.0
        %1138 = vmatpush.msra.mxu0 0.0
        %1139 = vmatpush.msra.mxu0 0.0
        %1140 = vmatpush.msra.mxu0 %v878
        %1141 = vmatmul.f32.gmra.mxu0 %v1123
        %v1142 = vpop.f32.mrf.mxu0
        %v1143 = vadd.f32 0.0, %v1142
        %1144 = vdwg.mxu0
        %v1145 = vsel %vm952, %v1102, 0
        %1147 = vmatpush.msra.mxu0 0.0
        %1148 = vmatpush.msra.mxu0 0.0
        %1149 = vmatpush.msra.mxu0 0.0
        %1150 = vmatpush.msra.mxu0 0.0
        %1151 = vmatpush.msra.mxu0 0.0
        %1152 = vmatpush.msra.mxu0 0.0
        %1153 = vmatpush.msra.mxu0 0.0
        %1154 = vmatpush.msra.mxu0 0.0
        %1155 = vmatpush.msra.mxu0 0.0
        %1156 = vmatpush.msra.mxu0 0.0
        %1157 = vmatpush.msra.mxu0 0.0
        %1158 = vmatpush.msra.mxu0 0.0
        %1159 = vmatpush.msra.mxu0 0.0
        %1160 = vmatpush.msra.mxu0 0.0
        %1161 = vmatpush.msra.mxu0 0.0
        %1162 = vmatpush.msra.mxu0 %v901
        %1163 = vmatmul.f32.gmra.mxu0 %v1145
        %v1164 = vpop.f32.mrf.mxu0
        %v1165 = vadd.f32 0.0, %v1164
        %1166 = vdwg.mxu0
        %v1167 = vsel %vm952, %v1103, 0
        %1169 = vmatpush.msra.mxu0 0.0
        %1170 = vmatpush.msra.mxu0 0.0
        %1171 = vmatpush.msra.mxu0 0.0
        %1172 = vmatpush.msra.mxu0 0.0
        %1173 = vmatpush.msra.mxu0 0.0
        %1174 = vmatpush.msra.mxu0 0.0
        %1175 = vmatpush.msra.mxu0 0.0
        %1176 = vmatpush.msra.mxu0 0.0
        %1177 = vmatpush.msra.mxu0 0.0
        %1178 = vmatpush.msra.mxu0 0.0
        %1179 = vmatpush.msra.mxu0 0.0
        %1180 = vmatpush.msra.mxu0 0.0
        %1181 = vmatpush.msra.mxu0 0.0
        %1182 = vmatpush.msra.mxu0 0.0
        %1183 = vmatpush.msra.mxu0 0.0
        %1184 = vmatpush.msra.mxu0 %v924
        %1185 = vmatmul.f32.gmra.mxu0 %v1167
        %v1186 = vpop.f32.mrf.mxu0
        %v1187 = vadd.f32 0.0, %v1186
        %1188 = vdwg.mxu0
        %v1189 = vsel %vm952, %v1104, 0
        %1191 = vmatpush.msra.mxu0 0.0
        %1192 = vmatpush.msra.mxu0 0.0
        %1193 = vmatpush.msra.mxu0 0.0
        %1194 = vmatpush.msra.mxu0 0.0
        %1195 = vmatpush.msra.mxu0 0.0
        %1196 = vmatpush.msra.mxu0 0.0
        %1197 = vmatpush.msra.mxu0 0.0
        %1198 = vmatpush.msra.mxu0 0.0
        %1199 = vmatpush.msra.mxu0 0.0
        %1200 = vmatpush.msra.mxu0 0.0
        %1201 = vmatpush.msra.mxu0 0.0
        %1202 = vmatpush.msra.mxu0 0.0
        %1203 = vmatpush.msra.mxu0 0.0
        %1204 = vmatpush.msra.mxu0 0.0
        %1205 = vmatpush.msra.mxu0 0.0
        %1206 = vmatpush.msra.mxu0 %v947
        %1207 = vmatmul.f32.gmra.mxu0 %v1189
        %v1208 = vpop.f32.mrf.mxu0
        %v1209 = vadd.f32 0.0, %v1208
        %1210 = vdwg.mxu0
        %v1212 = vsel %vm952, %v697, 0
        %v1215 = vsel %vm952, %v789, 0
        %1217 = vmatpush.xpose.msra.mxu0 0.0
        %1218 = vmatpush.xpose.msra.mxu0 0.0
        %1219 = vmatpush.xpose.msra.mxu0 0.0
        %1220 = vmatpush.xpose.msra.mxu0 0.0
        %1221 = vmatpush.xpose.msra.mxu0 0.0
        %1222 = vmatpush.xpose.msra.mxu0 0.0
        %1223 = vmatpush.xpose.msra.mxu0 0.0
        %1224 = vmatpush.xpose.msra.mxu0 0.0
        %1225 = vmatpush.xpose.msra.mxu0 0.0
        %1226 = vmatpush.xpose.msra.mxu0 0.0
        %1227 = vmatpush.xpose.msra.mxu0 0.0
        %1228 = vmatpush.xpose.msra.mxu0 0.0
        %1229 = vmatpush.xpose.msra.mxu0 0.0
        %1230 = vmatpush.xpose.msra.mxu0 0.0
        %1231 = vmatpush.xpose.msra.mxu0 0.0
        %1232 = vmatpush.xpose.msra.mxu0 %v1215
        %1233 = vmatmul.f32.gmra.mxu0 %v1212
        %v1234 = vpop.f32.mrf.mxu0
        %v1235 = vadd.f32 0.0, %v1234
        %1236 = vdwg.mxu0
        %v1238 = vsel %vm952, %v720, 0
        %v1241 = vsel %vm952, %v812, 0
        %1243 = vmatpush.xpose.msra.mxu0 0.0
        %1244 = vmatpush.xpose.msra.mxu0 0.0
        %1245 = vmatpush.xpose.msra.mxu0 0.0
        %1246 = vmatpush.xpose.msra.mxu0 0.0
        %1247 = vmatpush.xpose.msra.mxu0 0.0
        %1248 = vmatpush.xpose.msra.mxu0 0.0
        %1249 = vmatpush.xpose.msra.mxu0 0.0
        %1250 = vmatpush.xpose.msra.mxu0 0.0
        %1251 = vmatpush.xpose.msra.mxu0 0.0
        %1252 = vmatpush.xpose.msra.mxu0 0.0
        %1253 = vmatpush.xpose.msra.mxu0 0.0
        %1254 = vmatpush.xpose.msra.mxu0 0.0
        %1255 = vmatpush.xpose.msra.mxu0 0.0
        %1256 = vmatpush.xpose.msra.mxu0 0.0
        %1257 = vmatpush.xpose.msra.mxu0 0.0
        %1258 = vmatpush.xpose.msra.mxu0 %v1241
        %1259 = vmatmul.f32.gmra.mxu0 %v1238
        %v1260 = vpop.f32.mrf.mxu0
        %v1261 = vadd.f32 0.0, %v1260
        %1262 = vdwg.mxu0
        %v1264 = vsel %vm952, %v743, 0
        %v1267 = vsel %vm952, %v835, 0
        %1269 = vmatpush.xpose.msra.mxu0 0.0
        %1270 = vmatpush.xpose.msra.mxu0 0.0
        %1271 = vmatpush.xpose.msra.mxu0 0.0
        %1272 = vmatpush.xpose.msra.mxu0 0.0
        %1273 = vmatpush.xpose.msra.mxu0 0.0
        %1274 = vmatpush.xpose.msra.mxu0 0.0
        %1275 = vmatpush.xpose.msra.mxu0 0.0
        %1276 = vmatpush.xpose.msra.mxu0 0.0
        %1277 = vmatpush.xpose.msra.mxu0 0.0
        %1278 = vmatpush.xpose.msra.mxu0 0.0
        %1279 = vmatpush.xpose.msra.mxu0 0.0
        %1280 = vmatpush.xpose.msra.mxu0 0.0
        %1281 = vmatpush.xpose.msra.mxu0 0.0
        %1282 = vmatpush.xpose.msra.mxu0 0.0
        %1283 = vmatpush.xpose.msra.mxu0 0.0
        %1284 = vmatpush.xpose.msra.mxu0 %v1267
        %1285 = vmatmul.f32.gmra.mxu0 %v1264
        %v1286 = vpop.f32.mrf.mxu0
        %v1287 = vadd.f32 0.0, %v1286
        %1288 = vdwg.mxu0
        %v1290 = vsel %vm952, %v766, 0
        %v1293 = vsel %vm952, %v858, 0
        %1295 = vmatpush.xpose.msra.mxu0 0.0
        %1296 = vmatpush.xpose.msra.mxu0 0.0
        %1297 = vmatpush.xpose.msra.mxu0 0.0
        %1298 = vmatpush.xpose.msra.mxu0 0.0
        %1299 = vmatpush.xpose.msra.mxu0 0.0
        %1300 = vmatpush.xpose.msra.mxu0 0.0
        %1301 = vmatpush.xpose.msra.mxu0 0.0
        %1302 = vmatpush.xpose.msra.mxu0 0.0
        %1303 = vmatpush.xpose.msra.mxu0 0.0
        %1304 = vmatpush.xpose.msra.mxu0 0.0
        %1305 = vmatpush.xpose.msra.mxu0 0.0
        %1306 = vmatpush.xpose.msra.mxu0 0.0
        %1307 = vmatpush.xpose.msra.mxu0 0.0
        %1308 = vmatpush.xpose.msra.mxu0 0.0
        %1309 = vmatpush.xpose.msra.mxu0 0.0
        %1310 = vmatpush.xpose.msra.mxu0 %v1293
        %1311 = vmatmul.f32.gmra.mxu0 %v1290
        %v1312 = vpop.f32.mrf.mxu0
        %v1313 = vadd.f32 0.0, %v1312
        %1314 = vdwg.mxu0
        %v1315 = vmul.f32 %v1235, 0.35355338
        %v1316 = vmul.f32 %v1261, 0.35355338
        %v1317 = vmul.f32 %v1287, 0.35355338
        %v1318 = vmul.f32 %v1313, 0.35355338
        %v1319 = vsel %vm952, %v1315, -inf
        %1320 = vmax.xlane.f32.xlu0 %v1319
        %v1321 = vpop.xlane.xlu0 %1320
        %v1322 = vsel %vm952, %v1316, -inf
        %1323 = vmax.xlane.f32.xlu0 %v1322
        %v1324 = vpop.xlane.xlu0 %1323
        %v1325 = vsel %vm952, %v1317, -inf
        %1326 = vmax.xlane.f32.xlu0 %v1325
        %v1327 = vpop.xlane.xlu0 %1326
        %v1328 = vsel %vm952, %v1318, -inf
        %1329 = vmax.xlane.f32.xlu0 %v1328
        %v1330 = vpop.xlane.xlu0 %1329
        %v1331 = vsub.f32 %v1315, %v1321
        %v1332 = vsub.f32 %v1316, %v1324
        %v1333 = vsub.f32 %v1317, %v1327
        %v1334 = vsub.f32 %v1318, %v1330
        %v1335 = vmul.f32 %v1331, 1.442695
        %v1336 = vpow.pop %v1335
        %v1337 = vmul.f32 %v1332, 1.442695
        %v1338 = vpow.pop %v1337
        %v1339 = vmul.f32 %v1333, 1.442695
        %v1340 = vpow.pop %v1339
        %v1341 = vmul.f32 %v1334, 1.442695
        %v1342 = vpow.pop %v1341
        %v1343 = vsel %vm952, %v1336, 0.0
        %1344 = vadd.xlane.f32.xlu0 %v1343
        %v1345 = vpop.xlane.xlu0 %1344
        %v1346 = vsel %vm952, %v1338, 0.0
        %1347 = vadd.xlane.f32.xlu0 %v1346
        %v1348 = vpop.xlane.xlu0 %1347
        %v1349 = vsel %vm952, %v1340, 0.0
        %1350 = vadd.xlane.f32.xlu0 %v1349
        %v1351 = vpop.xlane.xlu0 %1350
        %v1352 = vsel %vm952, %v1342, 0.0
        %1353 = vadd.xlane.f32.xlu0 %v1352
        %v1354 = vpop.xlane.xlu0 %1353
        %v1355 = vrcp.pop %v1345
        %v1356 = vrcp.pop %v1348
        %v1357 = vrcp.pop %v1351
        %v1358 = vrcp.pop %v1354
        %v1359 = vmul.f32 %v1336, %v1355
        %v1360 = vmul.f32 %v1338, %v1356
        %v1361 = vmul.f32 %v1340, %v1357
        %v1362 = vmul.f32 %v1342, %v1358
        %1364 = vrot.lane.b32.xlu0 %v1360, 8
        %v1365 = vpop.permute.xlu0 %1364
        %1368 = vrot.lane.b32.xlu0 %v1361, 16
        %v1369 = vpop.permute.xlu0 %1368
        %1372 = vrot.lane.b32.xlu0 %v1362, 24
        %v1373 = vpop.permute.xlu0 %1372
        %v1375 = vsel %vm952, %v1359, %v1365
        %v1376 = vsel %vm1118, %v1375, %v1369
        %v1377 = vsel %vm1120, %v1376, %v1373
        %v1379 = vsel %vm952, %v1359, 0
        %1381 = vmatpush.msra.mxu0 0.0
        %1382 = vmatpush.msra.mxu0 0.0
        %1383 = vmatpush.msra.mxu0 0.0
        %1384 = vmatpush.msra.mxu0 0.0
        %1385 = vmatpush.msra.mxu0 0.0
        %1386 = vmatpush.msra.mxu0 0.0
        %1387 = vmatpush.msra.mxu0 0.0
        %1388 = vmatpush.msra.mxu0 0.0
        %1389 = vmatpush.msra.mxu0 0.0
        %1390 = vmatpush.msra.mxu0 0.0
        %1391 = vmatpush.msra.mxu0 0.0
        %1392 = vmatpush.msra.mxu0 0.0
        %1393 = vmatpush.msra.mxu0 0.0
        %1394 = vmatpush.msra.mxu0 0.0
        %1395 = vmatpush.msra.mxu0 0.0
        %1396 = vmatpush.msra.mxu0 %v881
        %1397 = vmatmul.f32.gmra.mxu0 %v1379
        %v1398 = vpop.f32.mrf.mxu0
        %v1399 = vadd.f32 0.0, %v1398
        %1400 = vdwg.mxu0
        %v1401 = vsel %vm952, %v1360, 0
        %1403 = vmatpush.msra.mxu0 0.0
        %1404 = vmatpush.msra.mxu0 0.0
        %1405 = vmatpush.msra.mxu0 0.0
        %1406 = vmatpush.msra.mxu0 0.0
        %1407 = vmatpush.msra.mxu0 0.0
        %1408 = vmatpush.msra.mxu0 0.0
        %1409 = vmatpush.msra.mxu0 0.0
        %1410 = vmatpush.msra.mxu0 0.0
        %1411 = vmatpush.msra.mxu0 0.0
        %1412 = vmatpush.msra.mxu0 0.0
        %1413 = vmatpush.msra.mxu0 0.0
        %1414 = vmatpush.msra.mxu0 0.0
        %1415 = vmatpush.msra.mxu0 0.0
        %1416 = vmatpush.msra.mxu0 0.0
        %1417 = vmatpush.msra.mxu0 0.0
        %1418 = vmatpush.msra.mxu0 %v904
        %1419 = vmatmul.f32.gmra.mxu0 %v1401
        %v1420 = vpop.f32.mrf.mxu0
        %v1421 = vadd.f32 0.0, %v1420
        %1422 = vdwg.mxu0
        %v1423 = vsel %vm952, %v1361, 0
        %1425 = vmatpush.msra.mxu0 0.0
        %1426 = vmatpush.msra.mxu0 0.0
        %1427 = vmatpush.msra.mxu0 0.0
        %1428 = vmatpush.msra.mxu0 0.0
        %1429 = vmatpush.msra.mxu0 0.0
        %1430 = vmatpush.msra.mxu0 0.0
        %1431 = vmatpush.msra.mxu0 0.0
        %1432 = vmatpush.msra.mxu0 0.0
        %1433 = vmatpush.msra.mxu0 0.0
        %1434 = vmatpush.msra.mxu0 0.0
        %1435 = vmatpush.msra.mxu0 0.0
        %1436 = vmatpush.msra.mxu0 0.0
        %1437 = vmatpush.msra.mxu0 0.0
        %1438 = vmatpush.msra.mxu0 0.0
        %1439 = vmatpush.msra.mxu0 0.0
        %1440 = vmatpush.msra.mxu0 %v927
        %1441 = vmatmul.f32.gmra.mxu0 %v1423
        %v1442 = vpop.f32.mrf.mxu0
        %v1443 = vadd.f32 0.0, %v1442
        %1444 = vdwg.mxu0
        %v1445 = vsel %vm952, %v1362, 0
        %1447 = vmatpush.msra.mxu0 0.0
        %1448 = vmatpush.msra.mxu0 0.0
        %1449 = vmatpush.msra.mxu0 0.0
        %1450 = vmatpush.msra.mxu0 0.0
        %1451 = vmatpush.msra.mxu0 0.0
        %1452 = vmatpush.msra.mxu0 0.0
        %1453 = vmatpush.msra.mxu0 0.0
        %1454 = vmatpush.msra.mxu0 0.0
        %1455 = vmatpush.msra.mxu0 0.0
        %1456 = vmatpush.msra.mxu0 0.0
        %1457 = vmatpush.msra.mxu0 0.0
        %1458 = vmatpush.msra.mxu0 0.0
        %1459 = vmatpush.msra.mxu0 0.0
        %1460 = vmatpush.msra.mxu0 0.0
        %1461 = vmatpush.msra.mxu0 0.0
        %1462 = vmatpush.msra.mxu0 %v950
        %1463 = vmatmul.f32.gmra.mxu0 %v1445
        %v1464 = vpop.f32.mrf.mxu0
        %v1465 = vadd.f32 0.0, %v1464
        %1466 = vdwg.mxu0
        %1467 = vst.msk [vmem:[%s503] sm:$0xff] %vm564, %v1121
        %1468 = vst.msk [vmem:[%s503 + $0x8] sm:$0xff] %vm564, %v1377
        %v1469 = vld [vmem:[%s485] sm:$0xff]
        %v1470 = vld [vmem:[%s485 + $0x8] sm:$0xff]
        %v1471 = vld [vmem:[%s485 + $0x10] sm:$0xff]
        %v1472 = vld [vmem:[%s485 + $0x18] sm:$0xff]
        %v1474 = vsel %vm952, %v1143, 0
        %v1477 = vsel %vm952, %v1399, 0
        %1479 = vmatpush.msra.mxu0 0.0
        %1480 = vmatpush.msra.mxu0 0.0
        %1481 = vmatpush.msra.mxu0 0.0
        %1482 = vmatpush.msra.mxu0 0.0
        %1483 = vmatpush.msra.mxu0 0.0
        %1484 = vmatpush.msra.mxu0 0.0
        %1485 = vmatpush.msra.mxu0 0.0
        %1486 = vmatpush.msra.mxu0 0.0
        %1487 = vmatpush.msra.mxu0 0.0
        %1488 = vmatpush.msra.mxu0 0.0
        %1489 = vmatpush.msra.mxu0 0.0
        %1490 = vmatpush.msra.mxu0 0.0
        %1491 = vmatpush.msra.mxu0 0.0
        %1492 = vmatpush.msra.mxu0 0.0
        %1493 = vmatpush.msra.mxu0 0.0
        %1494 = vmatpush.msra.mxu0 %v1469
        %1495 = vmatmul.f32.gmra.mxu0 %v1474
        %v1496 = vpop.f32.mrf.mxu0
        %v1497 = vadd.f32 0.0, %v1496
        %1498 = vmatmul.f32.gmra.mxu0 %v1477
        %v1499 = vpop.f32.mrf.mxu0
        %v1500 = vadd.f32 0.0, %v1499
        %1501 = vdwg.mxu0
        %v1503 = vsel %vm952, %v1165, 0
        %v1506 = vsel %vm952, %v1421, 0
        %1508 = vmatpush.msra.mxu0 0.0
        %1509 = vmatpush.msra.mxu0 0.0
        %1510 = vmatpush.msra.mxu0 0.0
        %1511 = vmatpush.msra.mxu0 0.0
        %1512 = vmatpush.msra.mxu0 0.0
        %1513 = vmatpush.msra.mxu0 0.0
        %1514 = vmatpush.msra.mxu0 0.0
        %1515 = vmatpush.msra.mxu0 0.0
        %1516 = vmatpush.msra.mxu0 0.0
        %1517 = vmatpush.msra.mxu0 0.0
        %1518 = vmatpush.msra.mxu0 0.0
        %1519 = vmatpush.msra.mxu0 0.0
        %1520 = vmatpush.msra.mxu0 0.0
        %1521 = vmatpush.msra.mxu0 0.0
        %1522 = vmatpush.msra.mxu0 0.0
        %1523 = vmatpush.msra.mxu0 %v1470
        %1524 = vmatmul.f32.gmra.mxu0 %v1503
        %v1525 = vpop.f32.mrf.mxu0
        %v1526 = vadd.f32 0.0, %v1525
        %1527 = vmatmul.f32.gmra.mxu0 %v1506
        %v1528 = vpop.f32.mrf.mxu0
        %v1529 = vadd.f32 0.0, %v1528
        %1530 = vdwg.mxu0
        %v1532 = vsel %vm952, %v1187, 0
        %v1535 = vsel %vm952, %v1443, 0
        %1537 = vmatpush.msra.mxu0 0.0
        %1538 = vmatpush.msra.mxu0 0.0
        %1539 = vmatpush.msra.mxu0 0.0
        %1540 = vmatpush.msra.mxu0 0.0
        %1541 = vmatpush.msra.mxu0 0.0
        %1542 = vmatpush.msra.mxu0 0.0
        %1543 = vmatpush.msra.mxu0 0.0
        %1544 = vmatpush.msra.mxu0 0.0
        %1545 = vmatpush.msra.mxu0 0.0
        %1546 = vmatpush.msra.mxu0 0.0
        %1547 = vmatpush.msra.mxu0 0.0
        %1548 = vmatpush.msra.mxu0 0.0
        %1549 = vmatpush.msra.mxu0 0.0
        %1550 = vmatpush.msra.mxu0 0.0
        %1551 = vmatpush.msra.mxu0 0.0
        %1552 = vmatpush.msra.mxu0 %v1471
        %1553 = vmatmul.f32.gmra.mxu0 %v1532
        %v1554 = vpop.f32.mrf.mxu0
        %v1555 = vadd.f32 0.0, %v1554
        %1556 = vmatmul.f32.gmra.mxu0 %v1535
        %v1557 = vpop.f32.mrf.mxu0
        %v1558 = vadd.f32 0.0, %v1557
        %1559 = vdwg.mxu0
        %v1561 = vsel %vm952, %v1209, 0
        %v1564 = vsel %vm952, %v1465, 0
        %1566 = vmatpush.msra.mxu0 0.0
        %1567 = vmatpush.msra.mxu0 0.0
        %1568 = vmatpush.msra.mxu0 0.0
        %1569 = vmatpush.msra.mxu0 0.0
        %1570 = vmatpush.msra.mxu0 0.0
        %1571 = vmatpush.msra.mxu0 0.0
        %1572 = vmatpush.msra.mxu0 0.0
        %1573 = vmatpush.msra.mxu0 0.0
        %1574 = vmatpush.msra.mxu0 0.0
        %1575 = vmatpush.msra.mxu0 0.0
        %1576 = vmatpush.msra.mxu0 0.0
        %1577 = vmatpush.msra.mxu0 0.0
        %1578 = vmatpush.msra.mxu0 0.0
        %1579 = vmatpush.msra.mxu0 0.0
        %1580 = vmatpush.msra.mxu0 0.0
        %1581 = vmatpush.msra.mxu0 %v1472
        %1582 = vmatmul.f32.gmra.mxu0 %v1561
        %v1583 = vpop.f32.mrf.mxu0
        %v1584 = vadd.f32 0.0, %v1583
        %1585 = vmatmul.f32.gmra.mxu0 %v1564
        %v1586 = vpop.f32.mrf.mxu0
        %v1587 = vadd.f32 0.0, %v1586
        %1588 = vdwg.mxu0
        %v1589 = vsel %vm564, %v1497, 0.0
        %v1590 = vsel %vm564, %v1526, 0.0
        %v1591 = vadd.f32 %v1589, %v1590
        %v1592 = vsel %vm564, %v1555, 0.0
        %v1593 = vadd.f32 %v1591, %v1592
        %v1594 = vsel %vm564, %v1584, 0.0
        %v1595 = vadd.f32 %v1593, %v1594
        %v1596 = vsel %vm564, %v1500, 0.0
        %v1597 = vsel %vm564, %v1529, 0.0
        %v1598 = vadd.f32 %v1596, %v1597
        %v1599 = vsel %vm564, %v1558, 0.0
        %v1600 = vadd.f32 %v1598, %v1599
        %v1601 = vsel %vm564, %v1587, 0.0
        %v1602 = vadd.f32 %v1600, %v1601
        %v1603 = vadd.f32 %v561, %v1595
        %v1604 = vadd.f32 %v562, %v1602
        %v1605 = vperm.slane %v563, 2
        %v1606 = vadd.f32 %v1603, %v1605
        %v1607 = vadd.f32 %v1604, %v1605
        %v1608 = vsel %vm564, %v1606, 0.0
        %1609 = vadd.xlane.f32.xlu0 %v1608
        %v1610 = vpop.xlane.xlu0 %1609
        %v1611 = vsel %vm564, %v1607, 0.0
        %1612 = vadd.xlane.f32.xlu0 %v1611
        %v1613 = vpop.xlane.xlu0 %1612
        %v1614 = vmul.f32 %v1610, %v577
        %v1615 = vmul.f32 %v1613, %v577
        %v1616 = vsub.f32 %v1606, %v1614
        %v1617 = vsub.f32 %v1607, %v1615
        %v1618 = vmul.f32 %v1616, %v1616
        %v1619 = vmul.f32 %v1617, %v1617
        %v1620 = vsel %vm564, %v1618, 0.0
        %1621 = vadd.xlane.f32.xlu0 %v1620
        %v1622 = vpop.xlane.xlu0 %1621
        %v1623 = vsel %vm564, %v1619, 0.0
        %1624 = vadd.xlane.f32.xlu0 %v1623
        %v1625 = vpop.xlane.xlu0 %1624
        %v1626 = vmul.f32 %v1622, %v577
        %v1627 = vmul.f32 %v1625, %v577
        %v1628 = vadd.f32 %v1626, 1e-05
        %v1629 = vadd.f32 %v1627, 1e-05
        %v1630 = vrsqrt.pop %v1628
        %v1631 = vmul.f32 %v1630, %v1628
        %v1632 = vmul.f32 %v1631, %v1630
        %v1633 = vmul.f32 0.5, %v1632
        %v1634 = vsub.f32 1.5, %v1633
        %v1635 = vmul.f32 %v1630, %v1634
        %vm1636 = vweird.f32 %v1628
        %vm1637 = vweird.f32 %v1630
        %vm1638 = vmor %vm1636, %vm1637
        %v1639 = vsel %vm1638, %v1630, %v1635
        %v1640 = vrsqrt.pop %v1629
        %v1641 = vmul.f32 %v1640, %v1629
        %v1642 = vmul.f32 %v1641, %v1640
        %v1643 = vmul.f32 0.5, %v1642
        %v1644 = vsub.f32 1.5, %v1643
        %v1645 = vmul.f32 %v1640, %v1644
        %vm1646 = vweird.f32 %v1629
        %vm1647 = vweird.f32 %v1640
        %vm1648 = vmor %vm1646, %vm1647
        %v1649 = vsel %vm1648, %v1640, %v1645
        %v1650 = vmul.f32 %v1616, %v1639
        %v1651 = vmul.f32 %v1617, %v1649
        %v1652 = vperm.slane %v563, 3
        %v1653 = vmul.f32 %v1650, %v1652
        %v1654 = vmul.f32 %v1651, %v1652
        %v1655 = vperm.slane %v563, 4
        %v1656 = vadd.f32 %v1653, %v1655
        %v1657 = vadd.f32 %v1654, %v1655
        %v1658 = vld [vmem:[%s490] sm:$0xff]
        %v1659 = vld [vmem:[%s490 + $0x8] sm:$0xff]
        %v1660 = vld [vmem:[%s490 + $0x10] sm:$0xff]
        %v1661 = vld [vmem:[%s490 + $0x18] sm:$0xff]
        %v1662 = vld [vmem:[%s493] sm:$0x1]
        %v1664 = vperm.slane %v1662, 0
        %v1667 = vsel %vm564, %v1656, 0
        %v1670 = vsel %vm564, %v1657, 0
        %1672 = vmatpush.msra.mxu0 0.0
        %1673 = vmatpush.msra.mxu0 0.0
        %1674 = vmatpush.msra.mxu0 0.0
        %1675 = vmatpush.msra.mxu0 0.0
        %1676 = vmatpush.msra.mxu0 0.0
        %1677 = vmatpush.msra.mxu0 0.0
        %1678 = vmatpush.msra.mxu0 0.0
        %1679 = vmatpush.msra.mxu0 0.0
        %1680 = vmatpush.msra.mxu0 0.0
        %1681 = vmatpush.msra.mxu0 0.0
        %1682 = vmatpush.msra.mxu0 0.0
        %1683 = vmatpush.msra.mxu0 0.0
        %1684 = vmatpush.msra.mxu0 %v1661
        %1685 = vmatpush.msra.mxu0 %v1660
        %1686 = vmatpush.msra.mxu0 %v1659
        %1687 = vmatpush.msra.mxu0 %v1658
        %1688 = vmatmul.f32.gmra.mxu0 %v1667
        %v1689 = vpop.f32.mrf.mxu0
        %v1690 = vadd.f32 %v1664, %v1689
        %1691 = vmatmul.f32.gmra.mxu0 %v1670
        %v1692 = vpop.f32.mrf.mxu0
        %v1693 = vadd.f32 %v1664, %v1692
        %1694 = vdwg.mxu0
        %v1695 = vmax.f32 %v1690, 0.0
        %v1696 = vmax.f32 %v1693, 0.0
        %v1697 = vld [vmem:[%s498] sm:$0xff]
        %v1698 = vld [vmem:[%s498 + $0x8] sm:$0xff]
        %v1699 = vld [vmem:[%s498 + $0x10] sm:$0xff]
        %v1700 = vld [vmem:[%s498 + $0x18] sm:$0xff]
        %v1701 = vld [vmem:[%s498 + $0x20] sm:$0xff]
        %v1702 = vld [vmem:[%s498 + $0x28] sm:$0xff]
        %v1703 = vld [vmem:[%s498 + $0x30] sm:$0xff]
        %v1704 = vld [vmem:[%s498 + $0x38] sm:$0xff]
        %v1705 = vld [vmem:[%s498 + $0x40] sm:$0xff]
        %v1706 = vld [vmem:[%s498 + $0x48] sm:$0xff]
        %v1707 = vld [vmem:[%s498 + $0x50] sm:$0xff]
        %v1708 = vld [vmem:[%s498 + $0x58] sm:$0xff]
        %v1709 = vld [vmem:[%s498 + $0x60] sm:$0xff]
        %v1710 = vld [vmem:[%s498 + $0x68] sm:$0xff]
        %v1711 = vld [vmem:[%s498 + $0x70] sm:$0xff]
        %v1712 = vld [vmem:[%s498 + $0x78] sm:$0xff]
        %1713 = vmatpush.msra.mxu0 %v1712
        %1714 = vmatpush.msra.mxu0 %v1711
        %1715 = vmatpush.msra.mxu0 %v1710
        %1716 = vmatpush.msra.mxu0 %v1709
        %1717 = vmatpush.msra.mxu0 %v1708
        %1718 = vmatpush.msra.mxu0 %v1707
        %1719 = vmatpush.msra.mxu0 %v1706
        %1720 = vmatpush.msra.mxu0 %v1705
        %1721 = vmatpush.msra.mxu0 %v1704
        %1722 = vmatpush.msra.mxu0 %v1703
        %1723 = vmatpush.msra.mxu0 %v1702
        %1724 = vmatpush.msra.mxu0 %v1701
        %1725 = vmatpush.msra.mxu0 %v1700
        %1726 = vmatpush.msra.mxu0 %v1699
        %1727 = vmatpush.msra.mxu0 %v1698
        %1728 = vmatpush.msra.mxu0 %v1697
        %1729 = vmatmul.f32.gmra.mxu0 %v1695
        %v1730 = vpop.f32.mrf.mxu0
        %v1731 = vadd.f32 0.0, %v1730
        %1732 = vmatmul.f32.gmra.mxu0 %v1696
        %v1733 = vpop.f32.mrf.mxu0
        %v1734 = vadd.f32 0.0, %v1733
        %1735 = vdwg.mxu0
        %v1736 = vadd.f32 %v1606, %v1731
        %v1737 = vadd.f32 %v1607, %v1734
        %v1738 = vperm.slane %v563, 5
        %v1739 = vadd.f32 %v1736, %v1738
        %v1740 = vadd.f32 %v1737, %v1738
        %p1741 = scmp.lt.s32.totalorder %s25, 1
        // Predicated region
        $region69: #{encoder_forward.1} parent=63 // pred_check
          %p1742 = pneg %p1741
        $region70: #{encoder_forward.1} parent=63 // pred_check_branch
          %1744 = sbr.rel (%p1742) target = $region72
        $region71: #{encoder_forward.1} parent=63 // pred_region
          %1745 = vst.msk [vmem:[#allocation2] sm:$0xff] %vm564, %v1739
          %1746 = vst.msk [vmem:[#allocation2 + $0x8] sm:$0xff] %vm564, %v1740
        $region72: #{encoder_forward.1} parent=63 // pred_fallthru
          _
        %p1747 = scmp.eq.s32.totalorder %s25, 1
        // Predicated region
        $region73: #{encoder_forward.1} parent=63 // pred_check
          %p1748 = pneg %p1747
        $region74: #{encoder_forward.1} parent=63 // pred_check_branch
          %1750 = sbr.rel (%p1748) target = $region76
        $region75: #{encoder_forward.1} parent=63 // pred_region
          %v1751 = vld [vmem:[%s9] sm:$0x1]
          %v1752 = vld [vmem:[%s10] sm:$0x1]
          %v1753 = vsel %vm564, %v1739, 0.0
          %1754 = vadd.xlane.f32.xlu0 %v1753
          %v1755 = vpop.xlane.xlu0 %1754
          %v1756 = vsel %vm564, %v1740, 0.0
          %1757 = vadd.xlane.f32.xlu0 %v1756
          %v1758 = vpop.xlane.xlu0 %1757
          %v1759 = vmul.f32 %v1755, %v577
          %v1760 = vmul.f32 %v1758, %v577
          %v1761 = vsub.f32 %v1739, %v1759
          %v1762 = vsub.f32 %v1740, %v1760
          %v1763 = vmul.f32 %v1761, %v1761
          %v1764 = vmul.f32 %v1762, %v1762
          %v1765 = vsel %vm564, %v1763, 0.0
          %1766 = vadd.xlane.f32.xlu0 %v1765
          %v1767 = vpop.xlane.xlu0 %1766
          %v1768 = vsel %vm564, %v1764, 0.0
          %1769 = vadd.xlane.f32.xlu0 %v1768
          %v1770 = vpop.xlane.xlu0 %1769
          %v1771 = vmul.f32 %v1767, %v577
          %v1772 = vmul.f32 %v1770, %v577
          %v1773 = vadd.f32 %v1771, 1e-05
          %v1774 = vadd.f32 %v1772, 1e-05
          %v1775 = vrsqrt.pop %v1773
          %v1776 = vmul.f32 %v1775, %v1773
          %v1777 = vmul.f32 %v1776, %v1775
          %v1778 = vmul.f32 0.5, %v1777
          %v1779 = vsub.f32 1.5, %v1778
          %v1780 = vmul.f32 %v1775, %v1779
          %vm1781 = vweird.f32 %v1773
          %vm1782 = vweird.f32 %v1775
          %vm1783 = vmor %vm1781, %vm1782
          %v1784 = vsel %vm1783, %v1775, %v1780
          %v1785 = vrsqrt.pop %v1774
          %v1786 = vmul.f32 %v1785, %v1774
          %v1787 = vmul.f32 %v1786, %v1785
          %v1788 = vmul.f32 0.5, %v1787
          %v1789 = vsub.f32 1.5, %v1788
          %v1790 = vmul.f32 %v1785, %v1789
          %vm1791 = vweird.f32 %v1774
          %vm1792 = vweird.f32 %v1785
          %vm1793 = vmor %vm1791, %vm1792
          %v1794 = vsel %vm1793, %v1785, %v1790
          %v1795 = vmul.f32 %v1761, %v1784
          %v1796 = vmul.f32 %v1762, %v1794
          %v1798 = vperm.slane %v1751, 0
          %v1800 = vmul.f32 %v1795, %v1798
          %v1801 = vmul.f32 %v1796, %v1798
          %v1803 = vperm.slane %v1752, 0
          %v1805 = vadd.f32 %v1800, %v1803
          %v1806 = vadd.f32 %v1801, %v1803
          %1807 = vst.msk [vmem:[#allocation2] sm:$0xff] %vm564, %v1805
          %1808 = vst.msk [vmem:[#allocation2 + $0x8] sm:$0xff] %vm564, %v1806
        $region76: #{encoder_forward.1} parent=63 // pred_fallthru
          _
        %p1809 = scmp.lt.s32.totalorder %s25, 1
        %s1810 = scalar_select %p1809, %s25, 1
        %s1811 = smul.addr %s1810, 2
        %s1812 = smul.addr %s1811, 8
        %s1813 = scalar_lea.vmem %s12, %s1812
        // Predicated region
        $region77: #{encoder_forward.1} parent=63 // pred_check
          %p1814 = pneg %p299
        $region78: #{encoder_forward.1} parent=63 // pred_check_branch
          %1816 = sbr.rel (%p1814) target = $region80
        $region79: #{encoder_forward.1} parent=63 // pred_region
          %1818 = vsyncadd [#allocation3], 0
          %s1819 = sshll.u32 [#allocation2], 4
          %s1820 = int_to_ptr.vmem [resolvable:$true] %s1819
          %s1821 = sshll.u32 %s11, 4
          %s1822 = int_to_ptr.hbm [resolvable:$true] %s1821
          %1827 = dma.vmem_to_hbm [thread:$0]  %s1820, 256, %s1822, [#allocation3], 128, 128, 8
        $region80: #{encoder_forward.1} parent=63 // pred_fallthru
          _
        // Predicated region
        $region81: #{encoder_forward.1} parent=63 // pred_check
          %p1828 = pneg %p325
        $region82: #{encoder_forward.1} parent=63 // pred_check_branch
          %1830 = sbr.rel (%p1828) target = $region84
        $region83: #{encoder_forward.1} parent=63 // pred_region
          _
        $region84: #{encoder_forward.1} parent=63 // pred_fallthru
          _
        // Predicated region
        $region85: #{encoder_forward.1} parent=63 // pred_check
          %p1831 = pneg %p299
        $region86: #{encoder_forward.1} parent=63 // pred_check_branch
          %1833 = sbr.rel (%p1831) target = $region88
        $region87: #{encoder_forward.1} parent=63 // pred_region
          %1835 = dma.done [#allocation3], 256
        $region88: #{encoder_forward.1} parent=63 // pred_fallthru
          _
      $region64: #{encoder_forward.1} parent=5 // pred_fallthru
        _
      %p1836 = scmp.le.s32.totalorder 2, %s20
      // Predicated region
      $region89: #{encoder_forward.1} parent=5 // pred_check
        %p1837 = pneg %p1836
      $region90: #{encoder_forward.1} parent=5 // pred_check_branch
        %1839 = sbr.rel (%p1837) target = $region92
      $region91: #{encoder_forward.1} parent=5 // pred_region
        %s1840 = ssub.s32 %s20, 2
        // Predicated region
        $region93: #{encoder_forward.1} parent=91 // pred_check
          %p1841 = pneg %p331
        $region94: #{encoder_forward.1} parent=91 // pred_check_branch
          %1843 = sbr.rel (%p1841) target = $region96
        $region95: #{encoder_forward.1} parent=91 // pred_region
          %p1844 = scmp.lt.s32.totalorder %s26, 1
          %s1845 = scalar_select %p1844, %s26, 1
          %s1846 = smul.addr %s1845, 2
          %s1847 = smul.addr %s1846, 8
          %s1848 = scalar_lea.vmem %s12, %s1847
        $region96: #{encoder_forward.1} parent=91 // pred_fallthru
          _
      $region92: #{encoder_forward.1} parent=5 // pred_fallthru
        _
    $region6: #{encoder_forward.1} parent=1 // loop_footer
      %s24 = sadd.s32 1, %s20
    $region7: #{encoder_forward.1} parent=1 // loop_footer_branch
      %19 = sbr.rel target = $region3
    $region8: #{encoder_forward.1} parent=1 // loop_exit
      _
    %1849 = vsyncpa [#allocation3], 1
    %s1850 = scalar_lea.sflag [#allocation3], 1
    %1851 = vsyncpa %s1850, 1

</llo_original>
